<compile_context>
chip_gen: v5e
topology: v5e:2x2
jax: 0.10.0
libtpu: 0.0.40
codegen_flags: <defaults>
</compile_context>

<pallas_src>
import functools

import jax
import jax.numpy as jnp
import numpy as np
from jax.experimental import pallas as pl
from jax.experimental.pallas import tpu as pltpu


# ----------------------------------------------------------------------------
# Pallas kernels: fused  (im2col-patches @ W + b) -> InstanceNorm -> [ReLU] [+res]
# ----------------------------------------------------------------------------
def _cnr_kernel(p_ref, w_ref, b_ref, o_ref, *, eps, apply_relu):
    """p_ref: (1, M, Kp)  w_ref: (Kp, Cp)  b_ref: (1, Cp)  o_ref: (1, M, Cp)."""
    acc = jnp.dot(p_ref[0], w_ref[...], preferred_element_type=jnp.float32)
    acc = acc + b_ref[...]
    # InstanceNorm2d (affine=False): per-sample, per-channel stats over H*W.
    mean = jnp.mean(acc, axis=0, keepdims=True)          # (1, Cp)
    cen = acc - mean
    var = jnp.mean(cen * cen, axis=0, keepdims=True)     # biased variance
    y = cen * jax.lax.rsqrt(var + eps)
    if apply_relu:
        y = jnp.maximum(y, 0.0)
    o_ref[0] = y.astype(o_ref.dtype)


def _cnr_res_kernel(p_ref, w_ref, b_ref, r_ref, o_ref, *, eps):
    """Same as _cnr_kernel (no ReLU) plus fused residual add: o = r + IN(p@w+b)."""
    acc = jnp.dot(p_ref[0], w_ref[...], preferred_element_type=jnp.float32)
    acc = acc + b_ref[...]
    mean = jnp.mean(acc, axis=0, keepdims=True)
    cen = acc - mean
    var = jnp.mean(cen * cen, axis=0, keepdims=True)
    y = cen * jax.lax.rsqrt(var + eps)
    o_ref[0] = (r_ref[0] + y).astype(o_ref.dtype)


def _cnr_pallas(patches_p, w_p, b_p, residual_p=None, *, apply_relu, eps):
    """patches_p: (N, M, Kp), w_p: (Kp, Cp), b_p: (1, Cp), residual_p: (N, M, Cp)?"""
    n, m, kp = patches_p.shape
    cp = w_p.shape[1]

    w_spec = pl.BlockSpec((kp, cp), lambda i: (0, 0))     # resident across grid
    b_spec = pl.BlockSpec((1, cp), lambda i: (0, 0))
    p_spec = pl.BlockSpec((1, m, kp), lambda i: (i, 0, 0))
    o_spec = pl.BlockSpec((1, m, cp), lambda i: (i, 0, 0))

    if residual_p is None:
        kern = functools.partial(_cnr_kernel, eps=eps, apply_relu=apply_relu)
        in_specs = [p_spec, w_spec, b_spec]
        args = (patches_p, w_p, b_p)
    else:
        kern = functools.partial(_cnr_res_kernel, eps=eps)
        r_spec = pl.BlockSpec((1, m, cp), lambda i: (i, 0, 0))
        in_specs = [p_spec, w_spec, b_spec, r_spec]
        args = (patches_p, w_p, b_p, residual_p)

    return pl.pallas_call(
        kern,
        out_shape=jax.ShapeDtypeStruct((n, m, cp), patches_p.dtype),
        grid=(n,),
        in_specs=in_specs,
        out_specs=o_spec,
        compiler_params=pltpu.CompilerParams(
            dimension_semantics=("parallel",)
        ),
    )(*args)


# ----------------------------------------------------------------------------
# Plain-JAX glue: reflection padding, im2col patch extraction, padding to 128
# ----------------------------------------------------------------------------
def _round_up(x, m):
    return ((x + m - 1) // m) * m


def _im2col_reflect(x_nchw, ksize, pad):
    """x: (N, C, H, W) -> patches (N, H*W, C*ksize*ksize), K-order = (c, kh, kw)."""
    n, c, h, w = x_nchw.shape
    xp = jnp.pad(x_nchw, ((0, 0), (0, 0), (pad, pad), (pad, pad)), mode="reflect")
    cols = []
    for kh in range(ksize):
        for kw in range(ksize):
            cols.append(xp[:, :, kh:kh + h, kw:kw + w])    # (N, C, H, W)
    pat = jnp.stack(cols, axis=2)                           # (N, C, k*k, H, W)
    pat = jnp.transpose(pat, (0, 3, 4, 1, 2))               # (N, H, W, C, k*k)
    return pat.reshape(n, h * w, c * ksize * ksize)


@functools.partial(jax.jit, static_argnames=("ksize", "pad", "eps"))
def resblock_forward(x, w1, b1, w2, b2, *, ksize=3, pad=1, eps=1e-5):
    n, c, h, w = x.shape
    m = h * w
    k = c * ksize * ksize
    kp = _round_up(k, 128)
    cp = _round_up(c, 128)

    def prep_w(wt, bt):
        wm = wt.reshape(wt.shape[0], -1).T                 # (K, Cout), K = (cin,kh,kw)
        wm = jnp.pad(wm, ((0, kp - k), (0, cp - c))).astype(jnp.float32)
        bm = jnp.pad(bt.reshape(1, -1), ((0, 0), (0, cp - c))).astype(jnp.float32)
        return wm, bm

    w1p, b1p = prep_w(w1, b1)
    w2p, b2p = prep_w(w2, b2)

    # --- block 1: reflect-pad -> conv3x3 -> InstanceNorm -> ReLU (fused) -------
    p1 = _im2col_reflect(x, ksize, pad)                    # (N, M, K)
    p1 = jnp.pad(p1, ((0, 0), (0, 0), (0, kp - k)))
    h1 = _cnr_pallas(p1, w1p, b1p, apply_relu=True, eps=eps)   # (N, M, Cp)

    # back to NCHW for the second reflect-pad + window extraction
    h1_nchw = jnp.transpose(h1[:, :, :c].reshape(n, h, w, c), (0, 3, 1, 2))

    # --- block 2: reflect-pad -> conv3x3 -> InstanceNorm -> +x (fused) --------
    p2 = _im2col_reflect(h1_nchw, ksize, pad)
    p2 = jnp.pad(p2, ((0, 0), (0, 0), (0, kp - k)))
    x_res = jnp.transpose(x, (0, 2, 3, 1)).reshape(n, m, c)
    x_res = jnp.pad(x_res, ((0, 0), (0, 0), (0, cp - c)))
    out = _cnr_pallas(p2, w2p, b2p, residual_p=x_res, apply_relu=False, eps=eps)

    return jnp.transpose(out[:, :, :c].reshape(n, h, w, c), (0, 3, 1, 2))


class ResBlockPallas:
    """JAX/Pallas equivalent of the PyTorch ResBlock (inorm, reflection pad, relu=0)."""

    def __init__(self, nch_in, nch_out, kernel_size=3, padding=1, eps=1e-5, key=None):
        assert nch_in == nch_out, "residual add requires nch_in == nch_out"
        if key is None:
            key = jax.random.PRNGKey(0)
        k1, k2, k3, k4 = jax.random.split(key, 4)
        fan_in = nch_in * kernel_size * kernel_size
        bound = 1.0 / np.sqrt(fan_in)
        shape_w = (nch_out, nch_in, kernel_size, kernel_size)
        self.w1 = jax.random.uniform(k1, shape_w, jnp.float32, -bound, bound)
        self.b1 = jax.random.uniform(k2, (nch_out,), jnp.float32, -bound, bound)
        self.w2 = jax.random.uniform(k3, shape_w, jnp.float32, -bound, bound)
        self.b2 = jax.random.uniform(k4, (nch_out,), jnp.float32, -bound, bound)
        self.kernel_size = kernel_size
        self.padding = padding
        self.eps = eps

    def __call__(self, x):
        return resblock_forward(
            x, self.w1, self.b1, self.w2, self.b2,
            ksize=self.kernel_size, pad=self.padding, eps=self.eps,
        )


# ----------------------------------------------------------------------------
# Pure-JAX reference for verification
# ----------------------------------------------------------------------------
def _ref_resblock(x, w1, b1, w2, b2, ksize=3, pad=1, eps=1e-5):
    def cnr(h_in, wt, bt, relu):
        hp = jnp.pad(h_in, ((0, 0), (0, 0), (pad, pad), (pad, pad)), mode="reflect")
        y = jax.lax.conv_general_dilated(
            hp, wt, window_strides=(1, 1), padding="VALID",
            dimension_numbers=("NCHW", "OIHW", "NCHW"),
        )
        y = y + bt.reshape(1, -1, 1, 1)
        mean = y.mean(axis=(2, 3), keepdims=True)
        var = ((y - mean) ** 2).mean(axis=(2, 3), keepdims=True)
        y = (y - mean) / jnp.sqrt(var + eps)
        if relu:
            y = jnp.maximum(y, 0.0)
        return y

    h = cnr(x, w1, b1, True)
    h = cnr(h, w2, b2, False)
    return x + h


if __name__ == "__main__":
    key = jax.random.PRNGKey(0)
    kx, kp = jax.random.split(key)
    N, C, H, W = 2, 4, 16, 16
    x = jax.random.normal(kx, (N, C, H, W), jnp.float32)

    mod = ResBlockPallas(nch_in=C, nch_out=C, kernel_size=3, padding=1, key=kp)
    y = jax.block_until_ready(mod(x))

    y_ref = _ref_resblock(x, mod.w1, mod.b1, mod.w2, mod.b2,
                          ksize=3, pad=1, eps=mod.eps)
    np.testing.assert_allclose(np.asarray(y), np.asarray(y_ref),
                               rtol=2e-4, atol=2e-4)
    assert y.shape == (N, C, H, W)
    print("KERNEL_OK")
</pallas_src>

<mosaic_0001>
module attributes {stable_mosaic.version = 11 : i64} {
  func.func @_cnr_kernel(%arg0: i32, %arg1: memref<1x256x128xf32, #tpu.memory_space<vmem>>, %arg2: memref<128x128xf32, #tpu.memory_space<vmem>>, %arg3: memref<1x128xf32, #tpu.memory_space<vmem>>, %arg4: memref<1x256x128xf32, #tpu.memory_space<vmem>>) attributes {dimension_semantics = [#tpu.dimension_semantics<parallel>], iteration_bounds = array<i64: 2>, scalar_prefetch = 0 : i64, scratch_operands = 0 : i64, tpu.core_type = #tpu.core_type<tc>, window_params = [{transform_indices = @transform_0, window_bounds = array<i64: 1, 256, 128>}, {pipeline_mode = #tpu.pipeline_mode<synchronous>, transform_indices = @transform_1, window_bounds = array<i64: 128, 128>}, {pipeline_mode = #tpu.pipeline_mode<synchronous>, transform_indices = @transform_2, window_bounds = array<i64: 1, 128>}, {transform_indices = @transform_3, window_bounds = array<i64: 1, 256, 128>}]} {
    %c0 = arith.constant 0 : index
    %c0_0 = arith.constant 0 : index
    %c0_1 = arith.constant 0 : index
    %0 = vector.load %arg1[%c0, %c0_0, %c0_1] : memref<1x256x128xf32, #tpu.memory_space<vmem>>, vector<1x256x128xf32>
    %1 = vector.shape_cast %0 : vector<1x256x128xf32> to vector<256x128xf32>
    %c0_2 = arith.constant 0 : index
    %c0_3 = arith.constant 0 : index
    %2 = vector.load %arg2[%c0_2, %c0_3] : memref<128x128xf32, #tpu.memory_space<vmem>>, vector<128x128xf32>
    %cst = arith.constant dense<0.000000e+00> : vector<256x128xf32>
    %3 = tpu.matmul %1, %2, %cst {dimension_numbers = #tpu.dot_dimension_numbers<[1], [0], [0], [1], [0, 0, 1, 1], [], []>} : vector<256x128xf32>, vector<128x128xf32>, vector<256x128xf32> -> vector<256x128xf32>
    %c0_4 = arith.constant 0 : index
    %c0_5 = arith.constant 0 : index
    %4 = vector.load %arg3[%c0_4, %c0_5] : memref<1x128xf32, #tpu.memory_space<vmem>>, vector<1x128xf32>
    %5 = vector.broadcast %4 : vector<1x128xf32> to vector<256x128xf32>
    %6 = arith.addf %3, %5 : vector<256x128xf32>
    %cst_6 = arith.constant dense<0.000000e+00> : vector<128xf32>
    %7 = vector.multi_reduction <add>, %6, %cst_6 [0] : vector<256x128xf32> to vector<128xf32>
    %8 = vector.shape_cast %7 : vector<128xf32> to vector<1x128xf32>
    %cst_7 = arith.constant 2.560000e+02 : f32
    %9 = vector.broadcast %cst_7 : f32 to vector<1x128xf32>
    %10 = arith.divf %8, %9 : vector<1x128xf32>
    %11 = vector.broadcast %10 : vector<1x128xf32> to vector<256x128xf32>
    %12 = arith.subf %6, %11 : vector<256x128xf32>
    %13 = arith.mulf %12, %12 : vector<256x128xf32>
    %cst_8 = arith.constant dense<0.000000e+00> : vector<128xf32>
    %14 = vector.multi_reduction <add>, %13, %cst_8 [0] : vector<256x128xf32> to vector<128xf32>
    %15 = vector.shape_cast %14 : vector<128xf32> to vector<1x128xf32>
    %cst_9 = arith.constant 2.560000e+02 : f32
    %16 = vector.broadcast %cst_9 : f32 to vector<1x128xf32>
    %17 = arith.divf %15, %16 : vector<1x128xf32>
    %cst_10 = arith.constant 9.99999974E-6 : f32
    %18 = vector.broadcast %cst_10 : f32 to vector<1x128xf32>
    %19 = arith.addf %17, %18 : vector<1x128xf32>
    %20 = math.rsqrt %19 : vector<1x128xf32>
    %21 = vector.broadcast %20 : vector<1x128xf32> to vector<256x128xf32>
    %22 = arith.mulf %12, %21 : vector<256x128xf32>
    %cst_11 = arith.constant 0.000000e+00 : f32
    %23 = vector.broadcast %cst_11 : f32 to vector<256x128xf32>
    %24 = arith.maximumf %22, %23 : vector<256x128xf32>
    %c0_12 = arith.constant 0 : index
    %c0_13 = arith.constant 0 : index
    %c0_14 = arith.constant 0 : index
    %25 = vector.load %arg4[%c0_12, %c0_13, %c0_14] : memref<1x256x128xf32, #tpu.memory_space<vmem>>, vector<1x256x128xf32>
    %26 = vector.shape_cast %25 : vector<1x256x128xf32> to vector<256x128xf32>
    %27 = vector.shape_cast %24 : vector<256x128xf32> to vector<1x256x128xf32>
    tpu.vector_store %arg4[%c0_12, %c0_13, %c0_14], %27 {strides = array<i32>} : memref<1x256x128xf32, #tpu.memory_space<vmem>>, vector<1x256x128xf32>,
    return
  }
  func.func @transform_0(%arg0: i32) -> (i32, i32, i32) {
    %c0_i32 = arith.constant 0 : i32
    %c0_i32_0 = arith.constant 0 : i32
    %c0_i32_1 = arith.constant 0 : i32
    return %arg0, %c0_i32, %c0_i32_0 : i32, i32, i32
  }
  func.func @transform_1(%arg0: i32) -> (i32, i32) {
    %c0_i32 = arith.constant 0 : i32
    %c0_i32_0 = arith.constant 0 : i32
    %c0_i32_1 = arith.constant 0 : i32
    return %c0_i32, %c0_i32_0 : i32, i32
  }
  func.func @transform_2(%arg0: i32) -> (i32, i32) {
    %c0_i32 = arith.constant 0 : i32
    %c0_i32_0 = arith.constant 0 : i32
    %c0_i32_1 = arith.constant 0 : i32
    return %c0_i32, %c0_i32_0 : i32, i32
  }
  func.func @transform_3(%arg0: i32) -> (i32, i32, i32) {
    %c0_i32 = arith.constant 0 : i32
    %c0_i32_0 = arith.constant 0 : i32
    %c0_i32_1 = arith.constant 0 : i32
    return %arg0, %c0_i32, %c0_i32_0 : i32, i32, i32
  }
}

module attributes {stable_mosaic.version = 11 : i64} {
  func.func @_cnr_res_kernel(%arg0: i32, %arg1: memref<1x256x128xf32, #tpu.memory_space<vmem>>, %arg2: memref<128x128xf32, #tpu.memory_space<vmem>>, %arg3: memref<1x128xf32, #tpu.memory_space<vmem>>, %arg4: memref<1x256x128xf32, #tpu.memory_space<vmem>>, %arg5: memref<1x256x128xf32, #tpu.memory_space<vmem>>) attributes {dimension_semantics = [#tpu.dimension_semantics<parallel>], iteration_bounds = array<i64: 2>, scalar_prefetch = 0 : i64, scratch_operands = 0 : i64, tpu.core_type = #tpu.core_type<tc>, window_params = [{transform_indices = @transform_0, window_bounds = array<i64: 1, 256, 128>}, {pipeline_mode = #tpu.pipeline_mode<synchronous>, transform_indices = @transform_1, window_bounds = array<i64: 128, 128>}, {pipeline_mode = #tpu.pipeline_mode<synchronous>, transform_indices = @transform_2, window_bounds = array<i64: 1, 128>}, {transform_indices = @transform_3, window_bounds = array<i64: 1, 256, 128>}, {transform_indices = @transform_4, window_bounds = array<i64: 1, 256, 128>}]} {
    %c0 = arith.constant 0 : index
    %c0_0 = arith.constant 0 : index
    %c0_1 = arith.constant 0 : index
    %0 = vector.load %arg1[%c0, %c0_0, %c0_1] : memref<1x256x128xf32, #tpu.memory_space<vmem>>, vector<1x256x128xf32>
    %1 = vector.shape_cast %0 : vector<1x256x128xf32> to vector<256x128xf32>
    %c0_2 = arith.constant 0 : index
    %c0_3 = arith.constant 0 : index
    %2 = vector.load %arg2[%c0_2, %c0_3] : memref<128x128xf32, #tpu.memory_space<vmem>>, vector<128x128xf32>
    %cst = arith.constant dense<0.000000e+00> : vector<256x128xf32>
    %3 = tpu.matmul %1, %2, %cst {dimension_numbers = #tpu.dot_dimension_numbers<[1], [0], [0], [1], [0, 0, 1, 1], [], []>} : vector<256x128xf32>, vector<128x128xf32>, vector<256x128xf32> -> vector<256x128xf32>
    %c0_4 = arith.constant 0 : index
    %c0_5 = arith.constant 0 : index
    %4 = vector.load %arg3[%c0_4, %c0_5] : memref<1x128xf32, #tpu.memory_space<vmem>>, vector<1x128xf32>
    %5 = vector.broadcast %4 : vector<1x128xf32> to vector<256x128xf32>
    %6 = arith.addf %3, %5 : vector<256x128xf32>
    %cst_6 = arith.constant dense<0.000000e+00> : vector<128xf32>
    %7 = vector.multi_reduction <add>, %6, %cst_6 [0] : vector<256x128xf32> to vector<128xf32>
    %8 = vector.shape_cast %7 : vector<128xf32> to vector<1x128xf32>
    %cst_7 = arith.constant 2.560000e+02 : f32
    %9 = vector.broadcast %cst_7 : f32 to vector<1x128xf32>
    %10 = arith.divf %8, %9 : vector<1x128xf32>
    %11 = vector.broadcast %10 : vector<1x128xf32> to vector<256x128xf32>
    %12 = arith.subf %6, %11 : vector<256x128xf32>
    %13 = arith.mulf %12, %12 : vector<256x128xf32>
    %cst_8 = arith.constant dense<0.000000e+00> : vector<128xf32>
    %14 = vector.multi_reduction <add>, %13, %cst_8 [0] : vector<256x128xf32> to vector<128xf32>
    %15 = vector.shape_cast %14 : vector<128xf32> to vector<1x128xf32>
    %cst_9 = arith.constant 2.560000e+02 : f32
    %16 = vector.broadcast %cst_9 : f32 to vector<1x128xf32>
    %17 = arith.divf %15, %16 : vector<1x128xf32>
    %cst_10 = arith.constant 9.99999974E-6 : f32
    %18 = vector.broadcast %cst_10 : f32 to vector<1x128xf32>
    %19 = arith.addf %17, %18 : vector<1x128xf32>
    %20 = math.rsqrt %19 : vector<1x128xf32>
    %21 = vector.broadcast %20 : vector<1x128xf32> to vector<256x128xf32>
    %22 = arith.mulf %12, %21 : vector<256x128xf32>
    %c0_11 = arith.constant 0 : index
    %c0_12 = arith.constant 0 : index
    %c0_13 = arith.constant 0 : index
    %23 = vector.load %arg4[%c0_11, %c0_12, %c0_13] : memref<1x256x128xf32, #tpu.memory_space<vmem>>, vector<1x256x128xf32>
    %24 = vector.shape_cast %23 : vector<1x256x128xf32> to vector<256x128xf32>
    %25 = arith.addf %24, %22 : vector<256x128xf32>
    %c0_14 = arith.constant 0 : index
    %c0_15 = arith.constant 0 : index
    %c0_16 = arith.constant 0 : index
    %26 = vector.load %arg5[%c0_14, %c0_15, %c0_16] : memref<1x256x128xf32, #tpu.memory_space<vmem>>, vector<1x256x128xf32>
    %27 = vector.shape_cast %26 : vector<1x256x128xf32> to vector<256x128xf32>
    %28 = vector.shape_cast %25 : vector<256x128xf32> to vector<1x256x128xf32>
    tpu.vector_store %arg5[%c0_14, %c0_15, %c0_16], %28 {strides = array<i32>} : memref<1x256x128xf32, #tpu.memory_space<vmem>>, vector<1x256x128xf32>,
    return
  }
  func.func @transform_0(%arg0: i32) -> (i32, i32, i32) {
    %c0_i32 = arith.constant 0 : i32
    %c0_i32_0 = arith.constant 0 : i32
    %c0_i32_1 = arith.constant 0 : i32
    return %arg0, %c0_i32, %c0_i32_0 : i32, i32, i32
  }
  func.func @transform_1(%arg0: i32) -> (i32, i32) {
    %c0_i32 = arith.constant 0 : i32
    %c0_i32_0 = arith.constant 0 : i32
    %c0_i32_1 = arith.constant 0 : i32
    return %c0_i32, %c0_i32_0 : i32, i32
  }
  func.func @transform_2(%arg0: i32) -> (i32, i32) {
    %c0_i32 = arith.constant 0 : i32
    %c0_i32_0 = arith.constant 0 : i32
    %c0_i32_1 = arith.constant 0 : i32
    return %c0_i32, %c0_i32_0 : i32, i32
  }
  func.func @transform_3(%arg0: i32) -> (i32, i32, i32) {
    %c0_i32 = arith.constant 0 : i32
    %c0_i32_0 = arith.constant 0 : i32
    %c0_i32_1 = arith.constant 0 : i32
    return %arg0, %c0_i32, %c0_i32_0 : i32, i32, i32
  }
  func.func @transform_4(%arg0: i32) -> (i32, i32, i32) {
    %c0_i32 = arith.constant 0 : i32
    %c0_i32_0 = arith.constant 0 : i32
    %c0_i32_1 = arith.constant 0 : i32
    return %arg0, %c0_i32, %c0_i32_0 : i32, i32, i32
  }
}

</mosaic_0001>

<llo_original>
// kernel: resblock_forward.2
$region0: #{resblock_forward.2}
  #allocation0 [shape = 'u32[]', space=smem, size = 0x4, offset = 0x4, fixed_abs, tag = 'smem constant byte address 0x4 - core index']
  #allocation1 [shape = 'u32[72,128]{1,0:T(1,128)}', space=vmem, size = 0x9000, scoped, tag = 'internal scratch']
  %s0 = inlined_call_operand.vmem [shape: f32[2,256,128], index: 0, kind: input, shape index: {}]
  %s1 = inlined_call_operand.vmem [shape: f32[128,128], index: 1, kind: input, shape index: {}]
  %s2 = inlined_call_operand.vmem [shape: f32[1,128], index: 2, kind: input, shape index: {}]
  %s3 = inlined_call_operand.vmem [shape: f32[2,256,128], index: 3, kind: output, shape index: {}]
  %s4 = sld [smem:[#allocation0]]
  $region45: #{resblock_forward.2} parent=0
    _
  %s6 = ssub.s32 1, %s4
  %s7 = scalar_select 0, %s6, %s4
  loop: start=0, step=1, limit=4
  $region2: #{resblock_forward.2} parent=0 // loop_pre_header
    _
  $region3: #{resblock_forward.2} parent=0 // loop_header
    %s9 = sphi 0, %s13
    %p10 = scmp.ge.s32.totalorder %s9, 4
    %s19 = sphi 0, %s21
    %s22 = sphi 0, %s19
    %s23 = sphi 0, %s22
    %s39 = sphi 0, %s23
    %s43 = sphi 0, %s43
    %s45 = sphi 0, %s43
    %s46 = sphi 0, %s45
    %s60 = sphi 0, %s46
    %s64 = sphi 0, %s64
    %s66 = sphi 0, %s64
    %s67 = sphi 0, %s66
    %s81 = sphi 0, %s67
    %s87 = sphi 0, %s89
    %s90 = sphi 0, %s87
    %s91 = sphi 0, %s90
    %s107 = sphi 0, %s91
  $region4: #{resblock_forward.2} parent=0 // loop_header_branch
    %12 = sbr.rel (%p10) target = $region8
  $region5: #{resblock_forward.2} parent=0 // loop_body
    %s14 = ssub.s32 %s9, 1
    %s15 = ssub.s32 %s9, 2
    %s16 = sadd.s32 %s9, 1
    %s17 = ssub.s32 %s9, %s16
    %p18 = scmp.eq.s32.totalorder %s17, 0
    %s20 = sadd.s32 %s19, 1
    %s21 = scalar_select %p18, %s19, %s20
    %p24 = pneg %p18
    %p25 = scmp.eq.s32.totalorder %s9, 1
    %p26 = por %p24, %p25
    %p27 = scmp.ne.s32.totalorder %s19, %s22
    %p28 = scmp.eq.s32.totalorder %s9, 0
    %p29 = por %p27, %p28
    %p30 = scmp.ne.s32.totalorder %s19, %s22
    %p31 = scmp.eq.s32.totalorder %s14, 1
    %p32 = por %p30, %p31
    %p33 = scmp.ne.s32.totalorder %s22, %s23
    %p34 = scmp.eq.s32.totalorder %s14, 0
    %p35 = por %p33, %p34
    %p36 = scmp.ne.s32.totalorder %s22, %s23
    %p37 = scmp.eq.s32.totalorder %s15, 1
    %p38 = por %p36, %p37
    %p40 = scmp.ne.s32.totalorder %s23, %s39
    %p41 = scmp.eq.s32.totalorder %s15, 0
    %p42 = por %p40, %p41
    %s44 = sadd.s32 %s43, 1
    %p47 = scmp.eq.s32.totalorder %s9, 1
    %p48 = scmp.ne.s32.totalorder %s43, %s45
    %p49 = scmp.eq.s32.totalorder %s9, 0
    %p50 = por %p48, %p49
    %p51 = scmp.ne.s32.totalorder %s43, %s45
    %p52 = scmp.eq.s32.totalorder %s14, 1
    %p53 = por %p51, %p52
    %p54 = scmp.ne.s32.totalorder %s45, %s46
    %p55 = scmp.eq.s32.totalorder %s14, 0
    %p56 = por %p54, %p55
    %p57 = scmp.ne.s32.totalorder %s45, %s46
    %p58 = scmp.eq.s32.totalorder %s15, 1
    %p59 = por %p57, %p58
    %p61 = scmp.ne.s32.totalorder %s46, %s60
    %p62 = scmp.eq.s32.totalorder %s15, 0
    %p63 = por %p61, %p62
    %s65 = sadd.s32 %s64, 1
    %p68 = scmp.eq.s32.totalorder %s9, 1
    %p69 = scmp.ne.s32.totalorder %s64, %s66
    %p70 = scmp.eq.s32.totalorder %s9, 0
    %p71 = por %p69, %p70
    %p72 = scmp.ne.s32.totalorder %s64, %s66
    %p73 = scmp.eq.s32.totalorder %s14, 1
    %p74 = por %p72, %p73
    %p75 = scmp.ne.s32.totalorder %s66, %s67
    %p76 = scmp.eq.s32.totalorder %s14, 0
    %p77 = por %p75, %p76
    %p78 = scmp.ne.s32.totalorder %s66, %s67
    %p79 = scmp.eq.s32.totalorder %s15, 1
    %p80 = por %p78, %p79
    %p82 = scmp.ne.s32.totalorder %s67, %s81
    %p83 = scmp.eq.s32.totalorder %s15, 0
    %p84 = por %p82, %p83
    %s85 = ssub.s32 %s9, %s16
    %p86 = scmp.eq.s32.totalorder %s85, 0
    %s88 = sadd.s32 %s87, 1
    %s89 = scalar_select %p86, %s87, %s88
    %p92 = pneg %p86
    %p93 = scmp.eq.s32.totalorder %s9, 1
    %p94 = por %p92, %p93
    %p95 = scmp.ne.s32.totalorder %s87, %s90
    %p96 = scmp.eq.s32.totalorder %s9, 0
    %p97 = por %p95, %p96
    %p98 = scmp.ne.s32.totalorder %s87, %s90
    %p99 = scmp.eq.s32.totalorder %s14, 1
    %p100 = por %p98, %p99
    %p101 = scmp.ne.s32.totalorder %s90, %s91
    %p102 = scmp.eq.s32.totalorder %s14, 0
    %p103 = por %p101, %p102
    %p104 = scmp.ne.s32.totalorder %s90, %s91
    %p105 = scmp.eq.s32.totalorder %s15, 1
    %p106 = por %p104, %p105
    %p108 = scmp.ne.s32.totalorder %s91, %s107
    %p109 = scmp.eq.s32.totalorder %s15, 0
    %p110 = por %p108, %p109
    %p111 = scmp.le.s32.totalorder 1, %s9
    %p112 = scmp.lt.s32.totalorder %s9, 3
    %p113 = pnand %p111, %p112
    %p114 = pneg %p113
    // Predicated region
    $region9: #{resblock_forward.2} parent=5 // pred_check
      _
    $region10: #{resblock_forward.2} parent=5 // pred_check_branch
      %116 = sbr.rel (%p113) target = $region12
    $region11: #{resblock_forward.2} parent=5 // pred_region
      %s117 = ssub.s32 %s9, 1
      // Predicated region
      $region13: #{resblock_forward.2} parent=11 // pred_check
        %p118 = pneg %p56
      $region14: #{resblock_forward.2} parent=11 // pred_check_branch
        %120 = sbr.rel (%p118) target = $region16
      $region15: #{resblock_forward.2} parent=11 // pred_region
        _
      $region16: #{resblock_forward.2} parent=11 // pred_fallthru
        _
      // Predicated region
      $region17: #{resblock_forward.2} parent=11 // pred_check
        %p121 = pneg %p77
      $region18: #{resblock_forward.2} parent=11 // pred_check_branch
        %123 = sbr.rel (%p121) target = $region20
      $region19: #{resblock_forward.2} parent=11 // pred_region
        _
      $region20: #{resblock_forward.2} parent=11 // pred_fallthru
        _
    $region12: #{resblock_forward.2} parent=5 // pred_fallthru
      _
    %p124 = scmp.lt.s32.totalorder %s9, 2
    // Predicated region
    $region21: #{resblock_forward.2} parent=5 // pred_check
      %p125 = pneg %p124
    $region22: #{resblock_forward.2} parent=5 // pred_check_branch
      %127 = sbr.rel (%p125) target = $region24
    $region23: #{resblock_forward.2} parent=5 // pred_region
      // Predicated region
      $region25: #{resblock_forward.2} parent=23 // pred_check
        %p128 = pneg %p29
      $region26: #{resblock_forward.2} parent=23 // pred_check_branch
        %130 = sbr.rel (%p128) target = $region28
      $region27: #{resblock_forward.2} parent=23 // pred_region
        %p131 = scmp.lt.s32.totalorder %s9, 1
        %s132 = scalar_select %p131, %s9, 1
        %s133 = smul.addr %s132, 32
        %s134 = smul.addr %s133, 8
        %s135 = scalar_lea.vmem %s0, %s134
      $region28: #{resblock_forward.2} parent=23 // pred_fallthru
        _
    $region24: #{resblock_forward.2} parent=5 // pred_fallthru
      _
    %p136 = scmp.le.s32.totalorder 1, %s9
    %p137 = scmp.lt.s32.totalorder %s9, 3
    %p138 = pnand %p136, %p137
    %p139 = pneg %p138
    // Predicated region
    $region29: #{resblock_forward.2} parent=5 // pred_check
      _
    $region30: #{resblock_forward.2} parent=5 // pred_check_branch
      %141 = sbr.rel (%p138) target = $region32
    $region31: #{resblock_forward.2} parent=5 // pred_region
      %s142 = ssub.s32 %s9, 1
      %p143 = scmp.lt.s32.totalorder %s14, 1
      %s144 = scalar_select %p143, %s14, 1
      %s145 = smul.addr %s144, 32
      %s146 = smul.addr %s145, 8
      %s147 = scalar_lea.vmem %s0, %s146
      %p148 = pneg %p35
      %p149 = pneg %p32
      %p150 = pneg %p56
      %p151 = pneg %p53
      %p152 = pneg %p77
      %p153 = pneg %p74
      %p154 = pneg %p103
      %p155 = pneg %p100
      %p156 = scmp.lt.s32.totalorder %s14, 1
      %s157 = scalar_select %p156, %s14, 1
      %s158 = smul.addr %s157, 32
      %s159 = smul.addr %s158, 8
      %s160 = scalar_lea.vmem %s3, %s159
      %p161 = scmp.lt.s32.totalorder %s14, 1
      %s162 = scalar_select %p161, %s14, 1
      %s163 = smul.addr %s162, 32
      %s164 = smul.addr %s163, 8
      %s165 = scalar_lea.vmem %s0, %s164
      %p166 = scmp.lt.s32.totalorder %s14, 1
      %s167 = scalar_select %p166, %s14, 1
      %s168 = smul.addr %s167, 32
      %s169 = smul.addr %s168, 8
      %s170 = scalar_lea.vmem %s3, %s169
      %v171 = vld [vmem:[%s165] sm:$0xff]
      %v172 = vld [vmem:[%s165 + $0x8] sm:$0xff]
      %v173 = vld [vmem:[%s165 + $0x10] sm:$0xff]
      %v174 = vld [vmem:[%s165 + $0x18] sm:$0xff]
      %v175 = vld [vmem:[%s165 + $0x20] sm:$0xff]
      %v176 = vld [vmem:[%s165 + $0x28] sm:$0xff]
      %v177 = vld [vmem:[%s165 + $0x30] sm:$0xff]
      %v178 = vld [vmem:[%s165 + $0x38] sm:$0xff]
      %v179 = vld [vmem:[%s165 + $0x40] sm:$0xff]
      %v180 = vld [vmem:[%s165 + $0x48] sm:$0xff]
      %v181 = vld [vmem:[%s165 + $0x50] sm:$0xff]
      %v182 = vld [vmem:[%s165 + $0x58] sm:$0xff]
      %v183 = vld [vmem:[%s165 + $0x60] sm:$0xff]
      %v184 = vld [vmem:[%s165 + $0x68] sm:$0xff]
      %v185 = vld [vmem:[%s165 + $0x70] sm:$0xff]
      %v186 = vld [vmem:[%s165 + $0x78] sm:$0xff]
      %v187 = vld [vmem:[%s165 + $0x80] sm:$0xff]
      %v188 = vld [vmem:[%s165 + $0x88] sm:$0xff]
      %v189 = vld [vmem:[%s165 + $0x90] sm:$0xff]
      %v190 = vld [vmem:[%s165 + $0x98] sm:$0xff]
      %v191 = vld [vmem:[%s165 + $0xa0] sm:$0xff]
      %v192 = vld [vmem:[%s165 + $0xa8] sm:$0xff]
      %v193 = vld [vmem:[%s165 + $0xb0] sm:$0xff]
      %v194 = vld [vmem:[%s165 + $0xb8] sm:$0xff]
      %v195 = vld [vmem:[%s165 + $0xc0] sm:$0xff]
      %v196 = vld [vmem:[%s165 + $0xc8] sm:$0xff]
      %v197 = vld [vmem:[%s165 + $0xd0] sm:$0xff]
      %v198 = vld [vmem:[%s165 + $0xd8] sm:$0xff]
      %v199 = vld [vmem:[%s165 + $0xe0] sm:$0xff]
      %v200 = vld [vmem:[%s165 + $0xe8] sm:$0xff]
      %v201 = vld [vmem:[%s165 + $0xf0] sm:$0xff]
      %v202 = vld [vmem:[%s165 + $0xf8] sm:$0xff]
      %v203 = vld [vmem:[%s1] sm:$0xff]
      %v204 = vld [vmem:[%s1 + $0x8] sm:$0xff]
      %v205 = vld [vmem:[%s1 + $0x10] sm:$0xff]
      %v206 = vld [vmem:[%s1 + $0x18] sm:$0xff]
      %v207 = vld [vmem:[%s1 + $0x20] sm:$0xff]
      %v208 = vld [vmem:[%s1 + $0x28] sm:$0xff]
      %v209 = vld [vmem:[%s1 + $0x30] sm:$0xff]
      %v210 = vld [vmem:[%s1 + $0x38] sm:$0xff]
      %v211 = vld [vmem:[%s1 + $0x40] sm:$0xff]
      %v212 = vld [vmem:[%s1 + $0x48] sm:$0xff]
      %v213 = vld [vmem:[%s1 + $0x50] sm:$0xff]
      %v214 = vld [vmem:[%s1 + $0x58] sm:$0xff]
      %v215 = vld [vmem:[%s1 + $0x60] sm:$0xff]
      %v216 = vld [vmem:[%s1 + $0x68] sm:$0xff]
      %v217 = vld [vmem:[%s1 + $0x70] sm:$0xff]
      %v218 = vld [vmem:[%s1 + $0x78] sm:$0xff]
      %v219 = vld [vmem:[%s2] sm:$0x1]
      %v221 = vperm.slane %v219, 0
      %223 = vmatpush.msra.mxu0 %v218
      %224 = vmatpush.msra.mxu0 %v217
      %225 = vmatpush.msra.mxu0 %v216
      %226 = vmatpush.msra.mxu0 %v215
      %227 = vmatpush.msra.mxu0 %v214
      %228 = vmatpush.msra.mxu0 %v213
      %229 = vmatpush.msra.mxu0 %v212
      %230 = vmatpush.msra.mxu0 %v211
      %231 = vmatpush.msra.mxu0 %v210
      %232 = vmatpush.msra.mxu0 %v209
      %233 = vmatpush.msra.mxu0 %v208
      %234 = vmatpush.msra.mxu0 %v207
      %235 = vmatpush.msra.mxu0 %v206
      %236 = vmatpush.msra.mxu0 %v205
      %237 = vmatpush.msra.mxu0 %v204
      %238 = vmatpush.msra.mxu0 %v203
      %239 = vmatmul.f32.gmra.mxu0 %v171
      %v240 = vpop.f32.mrf.mxu0
      %v241 = vadd.f32 %v221, %v240
      %242 = vmatmul.f32.gmra.mxu0 %v172
      %v243 = vpop.f32.mrf.mxu0
      %v244 = vadd.f32 %v221, %v243
      %245 = vmatmul.f32.gmra.mxu0 %v173
      %v246 = vpop.f32.mrf.mxu0
      %v247 = vadd.f32 %v221, %v246
      %248 = vmatmul.f32.gmra.mxu0 %v174
      %v249 = vpop.f32.mrf.mxu0
      %v250 = vadd.f32 %v221, %v249
      %251 = vmatmul.f32.gmra.mxu0 %v175
      %v252 = vpop.f32.mrf.mxu0
      %v253 = vadd.f32 %v221, %v252
      %254 = vmatmul.f32.gmra.mxu0 %v176
      %v255 = vpop.f32.mrf.mxu0
      %v256 = vadd.f32 %v221, %v255
      %257 = vmatmul.f32.gmra.mxu0 %v177
      %v258 = vpop.f32.mrf.mxu0
      %v259 = vadd.f32 %v221, %v258
      %260 = vmatmul.f32.gmra.mxu0 %v178
      %v261 = vpop.f32.mrf.mxu0
      %v262 = vadd.f32 %v221, %v261
      %263 = vmatmul.f32.gmra.mxu0 %v179
      %v264 = vpop.f32.mrf.mxu0
      %v265 = vadd.f32 %v221, %v264
      %266 = vmatmul.f32.gmra.mxu0 %v180
      %v267 = vpop.f32.mrf.mxu0
      %v268 = vadd.f32 %v221, %v267
      %269 = vmatmul.f32.gmra.mxu0 %v181
      %v270 = vpop.f32.mrf.mxu0
      %v271 = vadd.f32 %v221, %v270
      %272 = vmatmul.f32.gmra.mxu0 %v182
      %v273 = vpop.f32.mrf.mxu0
      %v274 = vadd.f32 %v221, %v273
      %275 = vmatmul.f32.gmra.mxu0 %v183
      %v276 = vpop.f32.mrf.mxu0
      %v277 = vadd.f32 %v221, %v276
      %278 = vmatmul.f32.gmra.mxu0 %v184
      %v279 = vpop.f32.mrf.mxu0
      %v280 = vadd.f32 %v221, %v279
      %281 = vmatmul.f32.gmra.mxu0 %v185
      %v282 = vpop.f32.mrf.mxu0
      %v283 = vadd.f32 %v221, %v282
      %284 = vmatmul.f32.gmra.mxu0 %v186
      %v285 = vpop.f32.mrf.mxu0
      %v286 = vadd.f32 %v221, %v285
      %287 = vmatmul.f32.gmra.mxu0 %v187
      %v288 = vpop.f32.mrf.mxu0
      %v289 = vadd.f32 %v221, %v288
      %290 = vmatmul.f32.gmra.mxu0 %v188
      %v291 = vpop.f32.mrf.mxu0
      %v292 = vadd.f32 %v221, %v291
      %293 = vmatmul.f32.gmra.mxu0 %v189
      %v294 = vpop.f32.mrf.mxu0
      %v295 = vadd.f32 %v221, %v294
      %296 = vmatmul.f32.gmra.mxu0 %v190
      %v297 = vpop.f32.mrf.mxu0
      %v298 = vadd.f32 %v221, %v297
      %299 = vmatmul.f32.gmra.mxu0 %v191
      %v300 = vpop.f32.mrf.mxu0
      %v301 = vadd.f32 %v221, %v300
      %302 = vmatmul.f32.gmra.mxu0 %v192
      %v303 = vpop.f32.mrf.mxu0
      %v304 = vadd.f32 %v221, %v303
      %305 = vmatmul.f32.gmra.mxu0 %v193
      %v306 = vpop.f32.mrf.mxu0
      %v307 = vadd.f32 %v221, %v306
      %308 = vmatmul.f32.gmra.mxu0 %v194
      %v309 = vpop.f32.mrf.mxu0
      %v310 = vadd.f32 %v221, %v309
      %311 = vmatmul.f32.gmra.mxu0 %v195
      %v312 = vpop.f32.mrf.mxu0
      %v313 = vadd.f32 %v221, %v312
      %314 = vmatmul.f32.gmra.mxu0 %v196
      %v315 = vpop.f32.mrf.mxu0
      %v316 = vadd.f32 %v221, %v315
      %317 = vmatmul.f32.gmra.mxu0 %v197
      %v318 = vpop.f32.mrf.mxu0
      %v319 = vadd.f32 %v221, %v318
      %320 = vmatmul.f32.gmra.mxu0 %v198
      %v321 = vpop.f32.mrf.mxu0
      %v322 = vadd.f32 %v221, %v321
      %323 = vmatmul.f32.gmra.mxu0 %v199
      %v324 = vpop.f32.mrf.mxu0
      %v325 = vadd.f32 %v221, %v324
      %326 = vmatmul.f32.gmra.mxu0 %v200
      %v327 = vpop.f32.mrf.mxu0
      %v328 = vadd.f32 %v221, %v327
      %329 = vmatmul.f32.gmra.mxu0 %v201
      %v330 = vpop.f32.mrf.mxu0
      %v331 = vadd.f32 %v221, %v330
      %332 = vmatmul.f32.gmra.mxu0 %v202
      %v333 = vpop.f32.mrf.mxu0
      %v334 = vadd.f32 %v221, %v333
      %335 = vdwg.mxu0
      %v336 = vadd.f32 %v241, %v244
      %v337 = vadd.f32 %v336, %v247
      %v338 = vadd.f32 %v337, %v250
      %v339 = vadd.f32 %v338, %v253
      %v340 = vadd.f32 %v339, %v256
      %v341 = vadd.f32 %v340, %v259
      %v342 = vadd.f32 %v341, %v262
      %v343 = vadd.f32 %v342, %v265
      %v344 = vadd.f32 %v343, %v268
      %v345 = vadd.f32 %v344, %v271
      %v346 = vadd.f32 %v345, %v274
      %v347 = vadd.f32 %v346, %v277
      %v348 = vadd.f32 %v347, %v280
      %v349 = vadd.f32 %v348, %v283
      %v350 = vadd.f32 %v349, %v286
      %v351 = vadd.f32 %v350, %v289
      %v352 = vadd.f32 %v351, %v292
      %v353 = vadd.f32 %v352, %v295
      %v354 = vadd.f32 %v353, %v298
      %v355 = vadd.f32 %v354, %v301
      %v356 = vadd.f32 %v355, %v304
      %v357 = vadd.f32 %v356, %v307
      %v358 = vadd.f32 %v357, %v310
      %v359 = vadd.f32 %v358, %v313
      %v360 = vadd.f32 %v359, %v316
      %v361 = vadd.f32 %v360, %v319
      %v362 = vadd.f32 %v361, %v322
      %v363 = vadd.f32 %v362, %v325
      %v364 = vadd.f32 %v363, %v328
      %v365 = vadd.f32 %v364, %v331
      %v366 = vadd.f32 %v365, %v334
      %v367 = vrot.slane %v366, 4
      %v368 = vadd.f32 %v366, %v367
      %v369 = vrot.slane %v368, 2
      %v370 = vadd.f32 %v368, %v369
      %v371 = vrot.slane %v370, 1
      %v372 = vadd.f32 %v370, %v371
      %v373 = vrcp.pop 256.0
      %v374 = vmul.f32 256.0, %v373
      %v375 = vsub.f32 1.0, %v374
      %v376 = vmul.f32 %v373, %v375
      %v377 = vadd.f32 %v373, %v376
      %vm378 = vweird.f32 %v373
      %v379 = vsel %vm378, %v373, %v377
      %v380 = vmul.f32 %v372, %v379
      %v381 = vsub.f32 %v241, %v380
      %v382 = vsub.f32 %v244, %v380
      %v383 = vsub.f32 %v247, %v380
      %v384 = vsub.f32 %v250, %v380
      %v385 = vsub.f32 %v253, %v380
      %v386 = vsub.f32 %v256, %v380
      %v387 = vsub.f32 %v259, %v380
      %v388 = vsub.f32 %v262, %v380
      %v389 = vsub.f32 %v265, %v380
      %v390 = vsub.f32 %v268, %v380
      %v391 = vsub.f32 %v271, %v380
      %v392 = vsub.f32 %v274, %v380
      %v393 = vsub.f32 %v277, %v380
      %v394 = vsub.f32 %v280, %v380
      %v395 = vsub.f32 %v283, %v380
      %v396 = vsub.f32 %v286, %v380
      %v397 = vsub.f32 %v289, %v380
      %v398 = vsub.f32 %v292, %v380
      %v399 = vsub.f32 %v295, %v380
      %v400 = vsub.f32 %v298, %v380
      %v401 = vsub.f32 %v301, %v380
      %v402 = vsub.f32 %v304, %v380
      %v403 = vsub.f32 %v307, %v380
      %v404 = vsub.f32 %v310, %v380
      %v405 = vsub.f32 %v313, %v380
      %v406 = vsub.f32 %v316, %v380
      %v407 = vsub.f32 %v319, %v380
      %v408 = vsub.f32 %v322, %v380
      %v409 = vsub.f32 %v325, %v380
      %v410 = vsub.f32 %v328, %v380
      %v411 = vsub.f32 %v331, %v380
      %v412 = vsub.f32 %v334, %v380
      %v413 = vmul.f32 %v381, %v381
      %v414 = vmul.f32 %v382, %v382
      %v415 = vmul.f32 %v383, %v383
      %v416 = vmul.f32 %v384, %v384
      %v417 = vmul.f32 %v385, %v385
      %v418 = vmul.f32 %v386, %v386
      %v419 = vmul.f32 %v387, %v387
      %v420 = vmul.f32 %v388, %v388
      %v421 = vmul.f32 %v389, %v389
      %v422 = vmul.f32 %v390, %v390
      %v423 = vmul.f32 %v391, %v391
      %v424 = vmul.f32 %v392, %v392
      %v425 = vmul.f32 %v393, %v393
      %v426 = vmul.f32 %v394, %v394
      %v427 = vmul.f32 %v395, %v395
      %v428 = vmul.f32 %v396, %v396
      %v429 = vmul.f32 %v397, %v397
      %v430 = vmul.f32 %v398, %v398
      %v431 = vmul.f32 %v399, %v399
      %v432 = vmul.f32 %v400, %v400
      %v433 = vmul.f32 %v401, %v401
      %v434 = vmul.f32 %v402, %v402
      %v435 = vmul.f32 %v403, %v403
      %v436 = vmul.f32 %v404, %v404
      %v437 = vmul.f32 %v405, %v405
      %v438 = vmul.f32 %v406, %v406
      %v439 = vmul.f32 %v407, %v407
      %v440 = vmul.f32 %v408, %v408
      %v441 = vmul.f32 %v409, %v409
      %v442 = vmul.f32 %v410, %v410
      %v443 = vmul.f32 %v411, %v411
      %v444 = vmul.f32 %v412, %v412
      %v445 = vadd.f32 %v413, %v414
      %v446 = vadd.f32 %v445, %v415
      %v447 = vadd.f32 %v446, %v416
      %v448 = vadd.f32 %v447, %v417
      %v449 = vadd.f32 %v448, %v418
      %v450 = vadd.f32 %v449, %v419
      %v451 = vadd.f32 %v450, %v420
      %v452 = vadd.f32 %v451, %v421
      %v453 = vadd.f32 %v452, %v422
      %v454 = vadd.f32 %v453, %v423
      %v455 = vadd.f32 %v454, %v424
      %v456 = vadd.f32 %v455, %v425
      %v457 = vadd.f32 %v456, %v426
      %v458 = vadd.f32 %v457, %v427
      %v459 = vadd.f32 %v458, %v428
      %v460 = vadd.f32 %v459, %v429
      %v461 = vadd.f32 %v460, %v430
      %v462 = vadd.f32 %v461, %v431
      %v463 = vadd.f32 %v462, %v432
      %v464 = vadd.f32 %v463, %v433
      %v465 = vadd.f32 %v464, %v434
      %v466 = vadd.f32 %v465, %v435
      %v467 = vadd.f32 %v466, %v436
      %v468 = vadd.f32 %v467, %v437
      %v469 = vadd.f32 %v468, %v438
      %v470 = vadd.f32 %v469, %v439
      %v471 = vadd.f32 %v470, %v440
      %v472 = vadd.f32 %v471, %v441
      %v473 = vadd.f32 %v472, %v442
      %v474 = vadd.f32 %v473, %v443
      %v475 = vadd.f32 %v474, %v444
      %v476 = vrot.slane %v475, 4
      %v477 = vadd.f32 %v475, %v476
      %v478 = vrot.slane %v477, 2
      %v479 = vadd.f32 %v477, %v478
      %v480 = vrot.slane %v479, 1
      %v481 = vadd.f32 %v479, %v480
      %v482 = vmul.f32 %v481, %v379
      %v483 = vadd.f32 %v482, 1e-05
      %v484 = vrsqrt.pop %v483
      %v485 = vmul.f32 %v484, %v483
      %v486 = vmul.f32 %v485, %v484
      %v487 = vmul.f32 0.5, %v486
      %v488 = vsub.f32 1.5, %v487
      %v489 = vmul.f32 %v484, %v488
      %vm490 = vweird.f32 %v483
      %vm491 = vweird.f32 %v484
      %vm492 = vmor %vm490, %vm491
      %v493 = vsel %vm492, %v484, %v489
      %v494 = vmul.f32 %v381, %v493
      %v495 = vmul.f32 %v382, %v493
      %v496 = vmul.f32 %v383, %v493
      %v497 = vmul.f32 %v384, %v493
      %v498 = vmul.f32 %v385, %v493
      %v499 = vmul.f32 %v386, %v493
      %v500 = vmul.f32 %v387, %v493
      %v501 = vmul.f32 %v388, %v493
      %v502 = vmul.f32 %v389, %v493
      %v503 = vmul.f32 %v390, %v493
      %v504 = vmul.f32 %v391, %v493
      %v505 = vmul.f32 %v392, %v493
      %v506 = vmul.f32 %v393, %v493
      %v507 = vmul.f32 %v394, %v493
      %v508 = vmul.f32 %v395, %v493
      %v509 = vmul.f32 %v396, %v493
      %v510 = vmul.f32 %v397, %v493
      %v511 = vmul.f32 %v398, %v493
      %v512 = vmul.f32 %v399, %v493
      %v513 = vmul.f32 %v400, %v493
      %v514 = vmul.f32 %v401, %v493
      %v515 = vmul.f32 %v402, %v493
      %v516 = vmul.f32 %v403, %v493
      %v517 = vmul.f32 %v404, %v493
      %v518 = vmul.f32 %v405, %v493
      %v519 = vmul.f32 %v406, %v493
      %v520 = vmul.f32 %v407, %v493
      %v521 = vmul.f32 %v408, %v493
      %v522 = vmul.f32 %v409, %v493
      %v523 = vmul.f32 %v410, %v493
      %v524 = vmul.f32 %v411, %v493
      %v525 = vmul.f32 %v412, %v493
      %v526 = vmax.f32 %v494, 0.0
      %v527 = vmax.f32 %v495, 0.0
      %v528 = vmax.f32 %v496, 0.0
      %v529 = vmax.f32 %v497, 0.0
      %v530 = vmax.f32 %v498, 0.0
      %v531 = vmax.f32 %v499, 0.0
      %v532 = vmax.f32 %v500, 0.0
      %v533 = vmax.f32 %v501, 0.0
      %v534 = vmax.f32 %v502, 0.0
      %v535 = vmax.f32 %v503, 0.0
      %v536 = vmax.f32 %v504, 0.0
      %v537 = vmax.f32 %v505, 0.0
      %v538 = vmax.f32 %v506, 0.0
      %v539 = vmax.f32 %v507, 0.0
      %v540 = vmax.f32 %v508, 0.0
      %v541 = vmax.f32 %v509, 0.0
      %v542 = vmax.f32 %v510, 0.0
      %v543 = vmax.f32 %v511, 0.0
      %v544 = vmax.f32 %v512, 0.0
      %v545 = vmax.f32 %v513, 0.0
      %v546 = vmax.f32 %v514, 0.0
      %v547 = vmax.f32 %v515, 0.0
      %v548 = vmax.f32 %v516, 0.0
      %v549 = vmax.f32 %v517, 0.0
      %v550 = vmax.f32 %v518, 0.0
      %v551 = vmax.f32 %v519, 0.0
      %v552 = vmax.f32 %v520, 0.0
      %v553 = vmax.f32 %v521, 0.0
      %v554 = vmax.f32 %v522, 0.0
      %v555 = vmax.f32 %v523, 0.0
      %v556 = vmax.f32 %v524, 0.0
      %v557 = vmax.f32 %v525, 0.0
      %558 = vst [vmem:[%s170] sm:$0xff] %v526
      %559 = vst [vmem:[%s170 + $0x8] sm:$0xff] %v527
      %560 = vst [vmem:[%s170 + $0x10] sm:$0xff] %v528
      %561 = vst [vmem:[%s170 + $0x18] sm:$0xff] %v529
      %562 = vst [vmem:[%s170 + $0x20] sm:$0xff] %v530
      %563 = vst [vmem:[%s170 + $0x28] sm:$0xff] %v531
      %564 = vst [vmem:[%s170 + $0x30] sm:$0xff] %v532
      %565 = vst [vmem:[%s170 + $0x38] sm:$0xff] %v533
      %566 = vst [vmem:[%s170 + $0x40] sm:$0xff] %v534
      %567 = vst [vmem:[%s170 + $0x48] sm:$0xff] %v535
      %568 = vst [vmem:[%s170 + $0x50] sm:$0xff] %v536
      %569 = vst [vmem:[%s170 + $0x58] sm:$0xff] %v537
      %570 = vst [vmem:[%s170 + $0x60] sm:$0xff] %v538
      %571 = vst [vmem:[%s170 + $0x68] sm:$0xff] %v539
      %572 = vst [vmem:[%s170 + $0x70] sm:$0xff] %v540
      %573 = vst [vmem:[%s170 + $0x78] sm:$0xff] %v541
      %574 = vst [vmem:[%s170 + $0x80] sm:$0xff] %v542
      %575 = vst [vmem:[%s170 + $0x88] sm:$0xff] %v543
      %576 = vst [vmem:[%s170 + $0x90] sm:$0xff] %v544
      %577 = vst [vmem:[%s170 + $0x98] sm:$0xff] %v545
      %578 = vst [vmem:[%s170 + $0xa0] sm:$0xff] %v546
      %579 = vst [vmem:[%s170 + $0xa8] sm:$0xff] %v547
      %580 = vst [vmem:[%s170 + $0xb0] sm:$0xff] %v548
      %581 = vst [vmem:[%s170 + $0xb8] sm:$0xff] %v549
      %582 = vst [vmem:[%s170 + $0xc0] sm:$0xff] %v550
      %583 = vst [vmem:[%s170 + $0xc8] sm:$0xff] %v551
      %584 = vst [vmem:[%s170 + $0xd0] sm:$0xff] %v552
      %585 = vst [vmem:[%s170 + $0xd8] sm:$0xff] %v553
      %586 = vst [vmem:[%s170 + $0xe0] sm:$0xff] %v554
      %587 = vst [vmem:[%s170 + $0xe8] sm:$0xff] %v555
      %588 = vst [vmem:[%s170 + $0xf0] sm:$0xff] %v556
      %589 = vst [vmem:[%s170 + $0xf8] sm:$0xff] %v557
      %p590 = scmp.lt.s32.totalorder %s14, 1
      %s591 = scalar_select %p590, %s14, 1
      %s592 = smul.addr %s591, 32
      %s593 = smul.addr %s592, 8
      %s594 = scalar_lea.vmem %s3, %s593
      // Predicated region
      $region33: #{resblock_forward.2} parent=31 // pred_check
        %p595 = pneg %p100
      $region34: #{resblock_forward.2} parent=31 // pred_check_branch
        %597 = sbr.rel (%p595) target = $region36
      $region35: #{resblock_forward.2} parent=31 // pred_region
        _
      $region36: #{resblock_forward.2} parent=31 // pred_fallthru
        _
    $region32: #{resblock_forward.2} parent=5 // pred_fallthru
      _
    %p598 = scmp.le.s32.totalorder 2, %s9
    // Predicated region
    $region37: #{resblock_forward.2} parent=5 // pred_check
      %p599 = pneg %p598
    $region38: #{resblock_forward.2} parent=5 // pred_check_branch
      %601 = sbr.rel (%p599) target = $region40
    $region39: #{resblock_forward.2} parent=5 // pred_region
      %s602 = ssub.s32 %s9, 2
      // Predicated region
      $region41: #{resblock_forward.2} parent=39 // pred_check
        %p603 = pneg %p106
      $region42: #{resblock_forward.2} parent=39 // pred_check_branch
        %605 = sbr.rel (%p603) target = $region44
      $region43: #{resblock_forward.2} parent=39 // pred_region
        %p606 = scmp.lt.s32.totalorder %s15, 1
        %s607 = scalar_select %p606, %s15, 1
        %s608 = smul.addr %s607, 32
        %s609 = smul.addr %s608, 8
        %s610 = scalar_lea.vmem %s3, %s609
      $region44: #{resblock_forward.2} parent=39 // pred_fallthru
        _
    $region40: #{resblock_forward.2} parent=5 // pred_fallthru
      _
  $region6: #{resblock_forward.2} parent=0 // loop_footer
    %s13 = sadd.s32 1, %s9
  $region7: #{resblock_forward.2} parent=0 // loop_footer_branch
    %8 = sbr.rel target = $region3
  $region8: #{resblock_forward.2} parent=0 // loop_exit
    _

// kernel: resblock_forward.3
$region0: #{resblock_forward.3}
  #allocation0 [shape = 'u32[]', space=smem, size = 0x4, offset = 0x4, fixed_abs, tag = 'smem constant byte address 0x4 - core index']
  #allocation1 [shape = 'u32[72,128]{1,0:T(1,128)}', space=vmem, size = 0x9000, scoped, tag = 'internal scratch']
  %s0 = inlined_call_operand.vmem [shape: f32[2,256,128], index: 0, kind: input, shape index: {}]
  %s1 = inlined_call_operand.vmem [shape: f32[128,128], index: 1, kind: input, shape index: {}]
  %s2 = inlined_call_operand.vmem [shape: f32[1,128], index: 2, kind: input, shape index: {}]
  %s3 = inlined_call_operand.vmem [shape: f32[2,256,128], index: 3, kind: input, shape index: {}]
  %s4 = inlined_call_operand.vmem [shape: f32[2,256,128], index: 4, kind: output, shape index: {}]
  %s5 = sld [smem:[#allocation0]]
  $region49: #{resblock_forward.3} parent=0
    _
  %s7 = ssub.s32 1, %s5
  %s8 = scalar_select 0, %s7, %s5
  loop: start=0, step=1, limit=4
  $region2: #{resblock_forward.3} parent=0 // loop_pre_header
    _
  $region3: #{resblock_forward.3} parent=0 // loop_header
    %s10 = sphi 0, %s14
    %p11 = scmp.ge.s32.totalorder %s10, 4
    %s20 = sphi 0, %s22
    %s23 = sphi 0, %s20
    %s24 = sphi 0, %s23
    %s40 = sphi 0, %s24
    %s44 = sphi 0, %s44
    %s46 = sphi 0, %s44
    %s47 = sphi 0, %s46
    %s61 = sphi 0, %s47
    %s65 = sphi 0, %s65
    %s67 = sphi 0, %s65
    %s68 = sphi 0, %s67
    %s82 = sphi 0, %s68
    %s88 = sphi 0, %s90
    %s91 = sphi 0, %s88
    %s92 = sphi 0, %s91
    %s108 = sphi 0, %s92
    %s114 = sphi 0, %s116
    %s117 = sphi 0, %s114
    %s118 = sphi 0, %s117
    %s134 = sphi 0, %s118
  $region4: #{resblock_forward.3} parent=0 // loop_header_branch
    %13 = sbr.rel (%p11) target = $region8
  $region5: #{resblock_forward.3} parent=0 // loop_body
    %s15 = ssub.s32 %s10, 1
    %s16 = ssub.s32 %s10, 2
    %s17 = sadd.s32 %s10, 1
    %s18 = ssub.s32 %s10, %s17
    %p19 = scmp.eq.s32.totalorder %s18, 0
    %s21 = sadd.s32 %s20, 1
    %s22 = scalar_select %p19, %s20, %s21
    %p25 = pneg %p19
    %p26 = scmp.eq.s32.totalorder %s10, 1
    %p27 = por %p25, %p26
    %p28 = scmp.ne.s32.totalorder %s20, %s23
    %p29 = scmp.eq.s32.totalorder %s10, 0
    %p30 = por %p28, %p29
    %p31 = scmp.ne.s32.totalorder %s20, %s23
    %p32 = scmp.eq.s32.totalorder %s15, 1
    %p33 = por %p31, %p32
    %p34 = scmp.ne.s32.totalorder %s23, %s24
    %p35 = scmp.eq.s32.totalorder %s15, 0
    %p36 = por %p34, %p35
    %p37 = scmp.ne.s32.totalorder %s23, %s24
    %p38 = scmp.eq.s32.totalorder %s16, 1
    %p39 = por %p37, %p38
    %p41 = scmp.ne.s32.totalorder %s24, %s40
    %p42 = scmp.eq.s32.totalorder %s16, 0
    %p43 = por %p41, %p42
    %s45 = sadd.s32 %s44, 1
    %p48 = scmp.eq.s32.totalorder %s10, 1
    %p49 = scmp.ne.s32.totalorder %s44, %s46
    %p50 = scmp.eq.s32.totalorder %s10, 0
    %p51 = por %p49, %p50
    %p52 = scmp.ne.s32.totalorder %s44, %s46
    %p53 = scmp.eq.s32.totalorder %s15, 1
    %p54 = por %p52, %p53
    %p55 = scmp.ne.s32.totalorder %s46, %s47
    %p56 = scmp.eq.s32.totalorder %s15, 0
    %p57 = por %p55, %p56
    %p58 = scmp.ne.s32.totalorder %s46, %s47
    %p59 = scmp.eq.s32.totalorder %s16, 1
    %p60 = por %p58, %p59
    %p62 = scmp.ne.s32.totalorder %s47, %s61
    %p63 = scmp.eq.s32.totalorder %s16, 0
    %p64 = por %p62, %p63
    %s66 = sadd.s32 %s65, 1
    %p69 = scmp.eq.s32.totalorder %s10, 1
    %p70 = scmp.ne.s32.totalorder %s65, %s67
    %p71 = scmp.eq.s32.totalorder %s10, 0
    %p72 = por %p70, %p71
    %p73 = scmp.ne.s32.totalorder %s65, %s67
    %p74 = scmp.eq.s32.totalorder %s15, 1
    %p75 = por %p73, %p74
    %p76 = scmp.ne.s32.totalorder %s67, %s68
    %p77 = scmp.eq.s32.totalorder %s15, 0
    %p78 = por %p76, %p77
    %p79 = scmp.ne.s32.totalorder %s67, %s68
    %p80 = scmp.eq.s32.totalorder %s16, 1
    %p81 = por %p79, %p80
    %p83 = scmp.ne.s32.totalorder %s68, %s82
    %p84 = scmp.eq.s32.totalorder %s16, 0
    %p85 = por %p83, %p84
    %s86 = ssub.s32 %s10, %s17
    %p87 = scmp.eq.s32.totalorder %s86, 0
    %s89 = sadd.s32 %s88, 1
    %s90 = scalar_select %p87, %s88, %s89
    %p93 = pneg %p87
    %p94 = scmp.eq.s32.totalorder %s10, 1
    %p95 = por %p93, %p94
    %p96 = scmp.ne.s32.totalorder %s88, %s91
    %p97 = scmp.eq.s32.totalorder %s10, 0
    %p98 = por %p96, %p97
    %p99 = scmp.ne.s32.totalorder %s88, %s91
    %p100 = scmp.eq.s32.totalorder %s15, 1
    %p101 = por %p99, %p100
    %p102 = scmp.ne.s32.totalorder %s91, %s92
    %p103 = scmp.eq.s32.totalorder %s15, 0
    %p104 = por %p102, %p103
    %p105 = scmp.ne.s32.totalorder %s91, %s92
    %p106 = scmp.eq.s32.totalorder %s16, 1
    %p107 = por %p105, %p106
    %p109 = scmp.ne.s32.totalorder %s92, %s108
    %p110 = scmp.eq.s32.totalorder %s16, 0
    %p111 = por %p109, %p110
    %s112 = ssub.s32 %s10, %s17
    %p113 = scmp.eq.s32.totalorder %s112, 0
    %s115 = sadd.s32 %s114, 1
    %s116 = scalar_select %p113, %s114, %s115
    %p119 = pneg %p113
    %p120 = scmp.eq.s32.totalorder %s10, 1
    %p121 = por %p119, %p120
    %p122 = scmp.ne.s32.totalorder %s114, %s117
    %p123 = scmp.eq.s32.totalorder %s10, 0
    %p124 = por %p122, %p123
    %p125 = scmp.ne.s32.totalorder %s114, %s117
    %p126 = scmp.eq.s32.totalorder %s15, 1
    %p127 = por %p125, %p126
    %p128 = scmp.ne.s32.totalorder %s117, %s118
    %p129 = scmp.eq.s32.totalorder %s15, 0
    %p130 = por %p128, %p129
    %p131 = scmp.ne.s32.totalorder %s117, %s118
    %p132 = scmp.eq.s32.totalorder %s16, 1
    %p133 = por %p131, %p132
    %p135 = scmp.ne.s32.totalorder %s118, %s134
    %p136 = scmp.eq.s32.totalorder %s16, 0
    %p137 = por %p135, %p136
    %p138 = scmp.le.s32.totalorder 1, %s10
    %p139 = scmp.lt.s32.totalorder %s10, 3
    %p140 = pnand %p138, %p139
    %p141 = pneg %p140
    // Predicated region
    $region9: #{resblock_forward.3} parent=5 // pred_check
      _
    $region10: #{resblock_forward.3} parent=5 // pred_check_branch
      %143 = sbr.rel (%p140) target = $region12
    $region11: #{resblock_forward.3} parent=5 // pred_region
      %s144 = ssub.s32 %s10, 1
      // Predicated region
      $region13: #{resblock_forward.3} parent=11 // pred_check
        %p145 = pneg %p57
      $region14: #{resblock_forward.3} parent=11 // pred_check_branch
        %147 = sbr.rel (%p145) target = $region16
      $region15: #{resblock_forward.3} parent=11 // pred_region
        _
      $region16: #{resblock_forward.3} parent=11 // pred_fallthru
        _
      // Predicated region
      $region17: #{resblock_forward.3} parent=11 // pred_check
        %p148 = pneg %p78
      $region18: #{resblock_forward.3} parent=11 // pred_check_branch
        %150 = sbr.rel (%p148) target = $region20
      $region19: #{resblock_forward.3} parent=11 // pred_region
        _
      $region20: #{resblock_forward.3} parent=11 // pred_fallthru
        _
    $region12: #{resblock_forward.3} parent=5 // pred_fallthru
      _
    %p151 = scmp.lt.s32.totalorder %s10, 2
    // Predicated region
    $region21: #{resblock_forward.3} parent=5 // pred_check
      %p152 = pneg %p151
    $region22: #{resblock_forward.3} parent=5 // pred_check_branch
      %154 = sbr.rel (%p152) target = $region24
    $region23: #{resblock_forward.3} parent=5 // pred_region
      // Predicated region
      $region25: #{resblock_forward.3} parent=23 // pred_check
        %p155 = pneg %p30
      $region26: #{resblock_forward.3} parent=23 // pred_check_branch
        %157 = sbr.rel (%p155) target = $region28
      $region27: #{resblock_forward.3} parent=23 // pred_region
        %p158 = scmp.lt.s32.totalorder %s10, 1
        %s159 = scalar_select %p158, %s10, 1
        %s160 = smul.addr %s159, 32
        %s161 = smul.addr %s160, 8
        %s162 = scalar_lea.vmem %s0, %s161
      $region28: #{resblock_forward.3} parent=23 // pred_fallthru
        _
      // Predicated region
      $region29: #{resblock_forward.3} parent=23 // pred_check
        %p163 = pneg %p98
      $region30: #{resblock_forward.3} parent=23 // pred_check_branch
        %165 = sbr.rel (%p163) target = $region32
      $region31: #{resblock_forward.3} parent=23 // pred_region
        %p166 = scmp.lt.s32.totalorder %s10, 1
        %s167 = scalar_select %p166, %s10, 1
        %s168 = smul.addr %s167, 32
        %s169 = smul.addr %s168, 8
        %s170 = scalar_lea.vmem %s3, %s169
      $region32: #{resblock_forward.3} parent=23 // pred_fallthru
        _
    $region24: #{resblock_forward.3} parent=5 // pred_fallthru
      _
    %p171 = scmp.le.s32.totalorder 1, %s10
    %p172 = scmp.lt.s32.totalorder %s10, 3
    %p173 = pnand %p171, %p172
    %p174 = pneg %p173
    // Predicated region
    $region33: #{resblock_forward.3} parent=5 // pred_check
      _
    $region34: #{resblock_forward.3} parent=5 // pred_check_branch
      %176 = sbr.rel (%p173) target = $region36
    $region35: #{resblock_forward.3} parent=5 // pred_region
      %s177 = ssub.s32 %s10, 1
      %p178 = scmp.lt.s32.totalorder %s15, 1
      %s179 = scalar_select %p178, %s15, 1
      %s180 = smul.addr %s179, 32
      %s181 = smul.addr %s180, 8
      %s182 = scalar_lea.vmem %s0, %s181
      %p183 = pneg %p36
      %p184 = pneg %p33
      %p185 = pneg %p57
      %p186 = pneg %p54
      %p187 = pneg %p78
      %p188 = pneg %p75
      %p189 = scmp.lt.s32.totalorder %s15, 1
      %s190 = scalar_select %p189, %s15, 1
      %s191 = smul.addr %s190, 32
      %s192 = smul.addr %s191, 8
      %s193 = scalar_lea.vmem %s3, %s192
      %p194 = pneg %p104
      %p195 = pneg %p101
      %p196 = pneg %p130
      %p197 = pneg %p127
      %p198 = scmp.lt.s32.totalorder %s15, 1
      %s199 = scalar_select %p198, %s15, 1
      %s200 = smul.addr %s199, 32
      %s201 = smul.addr %s200, 8
      %s202 = scalar_lea.vmem %s4, %s201
      %p203 = scmp.lt.s32.totalorder %s15, 1
      %s204 = scalar_select %p203, %s15, 1
      %s205 = smul.addr %s204, 32
      %s206 = smul.addr %s205, 8
      %s207 = scalar_lea.vmem %s0, %s206
      %p208 = scmp.lt.s32.totalorder %s15, 1
      %s209 = scalar_select %p208, %s15, 1
      %s210 = smul.addr %s209, 32
      %s211 = smul.addr %s210, 8
      %s212 = scalar_lea.vmem %s3, %s211
      %p213 = scmp.lt.s32.totalorder %s15, 1
      %s214 = scalar_select %p213, %s15, 1
      %s215 = smul.addr %s214, 32
      %s216 = smul.addr %s215, 8
      %s217 = scalar_lea.vmem %s4, %s216
      %v218 = vld [vmem:[%s207] sm:$0xff]
      %v219 = vld [vmem:[%s207 + $0x8] sm:$0xff]
      %v220 = vld [vmem:[%s207 + $0x10] sm:$0xff]
      %v221 = vld [vmem:[%s207 + $0x18] sm:$0xff]
      %v222 = vld [vmem:[%s207 + $0x20] sm:$0xff]
      %v223 = vld [vmem:[%s207 + $0x28] sm:$0xff]
      %v224 = vld [vmem:[%s207 + $0x30] sm:$0xff]
      %v225 = vld [vmem:[%s207 + $0x38] sm:$0xff]
      %v226 = vld [vmem:[%s207 + $0x40] sm:$0xff]
      %v227 = vld [vmem:[%s207 + $0x48] sm:$0xff]
      %v228 = vld [vmem:[%s207 + $0x50] sm:$0xff]
      %v229 = vld [vmem:[%s207 + $0x58] sm:$0xff]
      %v230 = vld [vmem:[%s207 + $0x60] sm:$0xff]
      %v231 = vld [vmem:[%s207 + $0x68] sm:$0xff]
      %v232 = vld [vmem:[%s207 + $0x70] sm:$0xff]
      %v233 = vld [vmem:[%s207 + $0x78] sm:$0xff]
      %v234 = vld [vmem:[%s207 + $0x80] sm:$0xff]
      %v235 = vld [vmem:[%s207 + $0x88] sm:$0xff]
      %v236 = vld [vmem:[%s207 + $0x90] sm:$0xff]
      %v237 = vld [vmem:[%s207 + $0x98] sm:$0xff]
      %v238 = vld [vmem:[%s207 + $0xa0] sm:$0xff]
      %v239 = vld [vmem:[%s207 + $0xa8] sm:$0xff]
      %v240 = vld [vmem:[%s207 + $0xb0] sm:$0xff]
      %v241 = vld [vmem:[%s207 + $0xb8] sm:$0xff]
      %v242 = vld [vmem:[%s207 + $0xc0] sm:$0xff]
      %v243 = vld [vmem:[%s207 + $0xc8] sm:$0xff]
      %v244 = vld [vmem:[%s207 + $0xd0] sm:$0xff]
      %v245 = vld [vmem:[%s207 + $0xd8] sm:$0xff]
      %v246 = vld [vmem:[%s207 + $0xe0] sm:$0xff]
      %v247 = vld [vmem:[%s207 + $0xe8] sm:$0xff]
      %v248 = vld [vmem:[%s207 + $0xf0] sm:$0xff]
      %v249 = vld [vmem:[%s207 + $0xf8] sm:$0xff]
      %v250 = vld [vmem:[%s1] sm:$0xff]
      %v251 = vld [vmem:[%s1 + $0x8] sm:$0xff]
      %v252 = vld [vmem:[%s1 + $0x10] sm:$0xff]
      %v253 = vld [vmem:[%s1 + $0x18] sm:$0xff]
      %v254 = vld [vmem:[%s1 + $0x20] sm:$0xff]
      %v255 = vld [vmem:[%s1 + $0x28] sm:$0xff]
      %v256 = vld [vmem:[%s1 + $0x30] sm:$0xff]
      %v257 = vld [vmem:[%s1 + $0x38] sm:$0xff]
      %v258 = vld [vmem:[%s1 + $0x40] sm:$0xff]
      %v259 = vld [vmem:[%s1 + $0x48] sm:$0xff]
      %v260 = vld [vmem:[%s1 + $0x50] sm:$0xff]
      %v261 = vld [vmem:[%s1 + $0x58] sm:$0xff]
      %v262 = vld [vmem:[%s1 + $0x60] sm:$0xff]
      %v263 = vld [vmem:[%s1 + $0x68] sm:$0xff]
      %v264 = vld [vmem:[%s1 + $0x70] sm:$0xff]
      %v265 = vld [vmem:[%s1 + $0x78] sm:$0xff]
      %v266 = vld [vmem:[%s2] sm:$0x1]
      %v268 = vperm.slane %v266, 0
      %270 = vmatpush.msra.mxu0 %v265
      %271 = vmatpush.msra.mxu0 %v264
      %272 = vmatpush.msra.mxu0 %v263
      %273 = vmatpush.msra.mxu0 %v262
      %274 = vmatpush.msra.mxu0 %v261
      %275 = vmatpush.msra.mxu0 %v260
      %276 = vmatpush.msra.mxu0 %v259
      %277 = vmatpush.msra.mxu0 %v258
      %278 = vmatpush.msra.mxu0 %v257
      %279 = vmatpush.msra.mxu0 %v256
      %280 = vmatpush.msra.mxu0 %v255
      %281 = vmatpush.msra.mxu0 %v254
      %282 = vmatpush.msra.mxu0 %v253
      %283 = vmatpush.msra.mxu0 %v252
      %284 = vmatpush.msra.mxu0 %v251
      %285 = vmatpush.msra.mxu0 %v250
      %286 = vmatmul.f32.gmra.mxu0 %v218
      %v287 = vpop.f32.mrf.mxu0
      %v288 = vadd.f32 %v268, %v287
      %289 = vmatmul.f32.gmra.mxu0 %v219
      %v290 = vpop.f32.mrf.mxu0
      %v291 = vadd.f32 %v268, %v290
      %292 = vmatmul.f32.gmra.mxu0 %v220
      %v293 = vpop.f32.mrf.mxu0
      %v294 = vadd.f32 %v268, %v293
      %295 = vmatmul.f32.gmra.mxu0 %v221
      %v296 = vpop.f32.mrf.mxu0
      %v297 = vadd.f32 %v268, %v296
      %298 = vmatmul.f32.gmra.mxu0 %v222
      %v299 = vpop.f32.mrf.mxu0
      %v300 = vadd.f32 %v268, %v299
      %301 = vmatmul.f32.gmra.mxu0 %v223
      %v302 = vpop.f32.mrf.mxu0
      %v303 = vadd.f32 %v268, %v302
      %304 = vmatmul.f32.gmra.mxu0 %v224
      %v305 = vpop.f32.mrf.mxu0
      %v306 = vadd.f32 %v268, %v305
      %307 = vmatmul.f32.gmra.mxu0 %v225
      %v308 = vpop.f32.mrf.mxu0
      %v309 = vadd.f32 %v268, %v308
      %310 = vmatmul.f32.gmra.mxu0 %v226
      %v311 = vpop.f32.mrf.mxu0
      %v312 = vadd.f32 %v268, %v311
      %313 = vmatmul.f32.gmra.mxu0 %v227
      %v314 = vpop.f32.mrf.mxu0
      %v315 = vadd.f32 %v268, %v314
      %316 = vmatmul.f32.gmra.mxu0 %v228
      %v317 = vpop.f32.mrf.mxu0
      %v318 = vadd.f32 %v268, %v317
      %319 = vmatmul.f32.gmra.mxu0 %v229
      %v320 = vpop.f32.mrf.mxu0
      %v321 = vadd.f32 %v268, %v320
      %322 = vmatmul.f32.gmra.mxu0 %v230
      %v323 = vpop.f32.mrf.mxu0
      %v324 = vadd.f32 %v268, %v323
      %325 = vmatmul.f32.gmra.mxu0 %v231
      %v326 = vpop.f32.mrf.mxu0
      %v327 = vadd.f32 %v268, %v326
      %328 = vmatmul.f32.gmra.mxu0 %v232
      %v329 = vpop.f32.mrf.mxu0
      %v330 = vadd.f32 %v268, %v329
      %331 = vmatmul.f32.gmra.mxu0 %v233
      %v332 = vpop.f32.mrf.mxu0
      %v333 = vadd.f32 %v268, %v332
      %334 = vmatmul.f32.gmra.mxu0 %v234
      %v335 = vpop.f32.mrf.mxu0
      %v336 = vadd.f32 %v268, %v335
      %337 = vmatmul.f32.gmra.mxu0 %v235
      %v338 = vpop.f32.mrf.mxu0
      %v339 = vadd.f32 %v268, %v338
      %340 = vmatmul.f32.gmra.mxu0 %v236
      %v341 = vpop.f32.mrf.mxu0
      %v342 = vadd.f32 %v268, %v341
      %343 = vmatmul.f32.gmra.mxu0 %v237
      %v344 = vpop.f32.mrf.mxu0
      %v345 = vadd.f32 %v268, %v344
      %346 = vmatmul.f32.gmra.mxu0 %v238
      %v347 = vpop.f32.mrf.mxu0
      %v348 = vadd.f32 %v268, %v347
      %349 = vmatmul.f32.gmra.mxu0 %v239
      %v350 = vpop.f32.mrf.mxu0
      %v351 = vadd.f32 %v268, %v350
      %352 = vmatmul.f32.gmra.mxu0 %v240
      %v353 = vpop.f32.mrf.mxu0
      %v354 = vadd.f32 %v268, %v353
      %355 = vmatmul.f32.gmra.mxu0 %v241
      %v356 = vpop.f32.mrf.mxu0
      %v357 = vadd.f32 %v268, %v356
      %358 = vmatmul.f32.gmra.mxu0 %v242
      %v359 = vpop.f32.mrf.mxu0
      %v360 = vadd.f32 %v268, %v359
      %361 = vmatmul.f32.gmra.mxu0 %v243
      %v362 = vpop.f32.mrf.mxu0
      %v363 = vadd.f32 %v268, %v362
      %364 = vmatmul.f32.gmra.mxu0 %v244
      %v365 = vpop.f32.mrf.mxu0
      %v366 = vadd.f32 %v268, %v365
      %367 = vmatmul.f32.gmra.mxu0 %v245
      %v368 = vpop.f32.mrf.mxu0
      %v369 = vadd.f32 %v268, %v368
      %370 = vmatmul.f32.gmra.mxu0 %v246
      %v371 = vpop.f32.mrf.mxu0
      %v372 = vadd.f32 %v268, %v371
      %373 = vmatmul.f32.gmra.mxu0 %v247
      %v374 = vpop.f32.mrf.mxu0
      %v375 = vadd.f32 %v268, %v374
      %376 = vmatmul.f32.gmra.mxu0 %v248
      %v377 = vpop.f32.mrf.mxu0
      %v378 = vadd.f32 %v268, %v377
      %379 = vmatmul.f32.gmra.mxu0 %v249
      %v380 = vpop.f32.mrf.mxu0
      %v381 = vadd.f32 %v268, %v380
      %382 = vdwg.mxu0
      %v383 = vadd.f32 %v288, %v291
      %v384 = vadd.f32 %v383, %v294
      %v385 = vadd.f32 %v384, %v297
      %v386 = vadd.f32 %v385, %v300
      %v387 = vadd.f32 %v386, %v303
      %v388 = vadd.f32 %v387, %v306
      %v389 = vadd.f32 %v388, %v309
      %v390 = vadd.f32 %v389, %v312
      %v391 = vadd.f32 %v390, %v315
      %v392 = vadd.f32 %v391, %v318
      %v393 = vadd.f32 %v392, %v321
      %v394 = vadd.f32 %v393, %v324
      %v395 = vadd.f32 %v394, %v327
      %v396 = vadd.f32 %v395, %v330
      %v397 = vadd.f32 %v396, %v333
      %v398 = vadd.f32 %v397, %v336
      %v399 = vadd.f32 %v398, %v339
      %v400 = vadd.f32 %v399, %v342
      %v401 = vadd.f32 %v400, %v345
      %v402 = vadd.f32 %v401, %v348
      %v403 = vadd.f32 %v402, %v351
      %v404 = vadd.f32 %v403, %v354
      %v405 = vadd.f32 %v404, %v357
      %v406 = vadd.f32 %v405, %v360
      %v407 = vadd.f32 %v406, %v363
      %v408 = vadd.f32 %v407, %v366
      %v409 = vadd.f32 %v408, %v369
      %v410 = vadd.f32 %v409, %v372
      %v411 = vadd.f32 %v410, %v375
      %v412 = vadd.f32 %v411, %v378
      %v413 = vadd.f32 %v412, %v381
      %v414 = vrot.slane %v413, 4
      %v415 = vadd.f32 %v413, %v414
      %v416 = vrot.slane %v415, 2
      %v417 = vadd.f32 %v415, %v416
      %v418 = vrot.slane %v417, 1
      %v419 = vadd.f32 %v417, %v418
      %v420 = vrcp.pop 256.0
      %v421 = vmul.f32 256.0, %v420
      %v422 = vsub.f32 1.0, %v421
      %v423 = vmul.f32 %v420, %v422
      %v424 = vadd.f32 %v420, %v423
      %vm425 = vweird.f32 %v420
      %v426 = vsel %vm425, %v420, %v424
      %v427 = vmul.f32 %v419, %v426
      %v428 = vsub.f32 %v288, %v427
      %v429 = vsub.f32 %v291, %v427
      %v430 = vsub.f32 %v294, %v427
      %v431 = vsub.f32 %v297, %v427
      %v432 = vsub.f32 %v300, %v427
      %v433 = vsub.f32 %v303, %v427
      %v434 = vsub.f32 %v306, %v427
      %v435 = vsub.f32 %v309, %v427
      %v436 = vsub.f32 %v312, %v427
      %v437 = vsub.f32 %v315, %v427
      %v438 = vsub.f32 %v318, %v427
      %v439 = vsub.f32 %v321, %v427
      %v440 = vsub.f32 %v324, %v427
      %v441 = vsub.f32 %v327, %v427
      %v442 = vsub.f32 %v330, %v427
      %v443 = vsub.f32 %v333, %v427
      %v444 = vsub.f32 %v336, %v427
      %v445 = vsub.f32 %v339, %v427
      %v446 = vsub.f32 %v342, %v427
      %v447 = vsub.f32 %v345, %v427
      %v448 = vsub.f32 %v348, %v427
      %v449 = vsub.f32 %v351, %v427
      %v450 = vsub.f32 %v354, %v427
      %v451 = vsub.f32 %v357, %v427
      %v452 = vsub.f32 %v360, %v427
      %v453 = vsub.f32 %v363, %v427
      %v454 = vsub.f32 %v366, %v427
      %v455 = vsub.f32 %v369, %v427
      %v456 = vsub.f32 %v372, %v427
      %v457 = vsub.f32 %v375, %v427
      %v458 = vsub.f32 %v378, %v427
      %v459 = vsub.f32 %v381, %v427
      %v460 = vmul.f32 %v428, %v428
      %v461 = vmul.f32 %v429, %v429
      %v462 = vmul.f32 %v430, %v430
      %v463 = vmul.f32 %v431, %v431
      %v464 = vmul.f32 %v432, %v432
      %v465 = vmul.f32 %v433, %v433
      %v466 = vmul.f32 %v434, %v434
      %v467 = vmul.f32 %v435, %v435
      %v468 = vmul.f32 %v436, %v436
      %v469 = vmul.f32 %v437, %v437
      %v470 = vmul.f32 %v438, %v438
      %v471 = vmul.f32 %v439, %v439
      %v472 = vmul.f32 %v440, %v440
      %v473 = vmul.f32 %v441, %v441
      %v474 = vmul.f32 %v442, %v442
      %v475 = vmul.f32 %v443, %v443
      %v476 = vmul.f32 %v444, %v444
      %v477 = vmul.f32 %v445, %v445
      %v478 = vmul.f32 %v446, %v446
      %v479 = vmul.f32 %v447, %v447
      %v480 = vmul.f32 %v448, %v448
      %v481 = vmul.f32 %v449, %v449
      %v482 = vmul.f32 %v450, %v450
      %v483 = vmul.f32 %v451, %v451
      %v484 = vmul.f32 %v452, %v452
      %v485 = vmul.f32 %v453, %v453
      %v486 = vmul.f32 %v454, %v454
      %v487 = vmul.f32 %v455, %v455
      %v488 = vmul.f32 %v456, %v456
      %v489 = vmul.f32 %v457, %v457
      %v490 = vmul.f32 %v458, %v458
      %v491 = vmul.f32 %v459, %v459
      %v492 = vadd.f32 %v460, %v461
      %v493 = vadd.f32 %v492, %v462
      %v494 = vadd.f32 %v493, %v463
      %v495 = vadd.f32 %v494, %v464
      %v496 = vadd.f32 %v495, %v465
      %v497 = vadd.f32 %v496, %v466
      %v498 = vadd.f32 %v497, %v467
      %v499 = vadd.f32 %v498, %v468
      %v500 = vadd.f32 %v499, %v469
      %v501 = vadd.f32 %v500, %v470
      %v502 = vadd.f32 %v501, %v471
      %v503 = vadd.f32 %v502, %v472
      %v504 = vadd.f32 %v503, %v473
      %v505 = vadd.f32 %v504, %v474
      %v506 = vadd.f32 %v505, %v475
      %v507 = vadd.f32 %v506, %v476
      %v508 = vadd.f32 %v507, %v477
      %v509 = vadd.f32 %v508, %v478
      %v510 = vadd.f32 %v509, %v479
      %v511 = vadd.f32 %v510, %v480
      %v512 = vadd.f32 %v511, %v481
      %v513 = vadd.f32 %v512, %v482
      %v514 = vadd.f32 %v513, %v483
      %v515 = vadd.f32 %v514, %v484
      %v516 = vadd.f32 %v515, %v485
      %v517 = vadd.f32 %v516, %v486
      %v518 = vadd.f32 %v517, %v487
      %v519 = vadd.f32 %v518, %v488
      %v520 = vadd.f32 %v519, %v489
      %v521 = vadd.f32 %v520, %v490
      %v522 = vadd.f32 %v521, %v491
      %v523 = vrot.slane %v522, 4
      %v524 = vadd.f32 %v522, %v523
      %v525 = vrot.slane %v524, 2
      %v526 = vadd.f32 %v524, %v525
      %v527 = vrot.slane %v526, 1
      %v528 = vadd.f32 %v526, %v527
      %v529 = vmul.f32 %v528, %v426
      %v530 = vadd.f32 %v529, 1e-05
      %v531 = vrsqrt.pop %v530
      %v532 = vmul.f32 %v531, %v530
      %v533 = vmul.f32 %v532, %v531
      %v534 = vmul.f32 0.5, %v533
      %v535 = vsub.f32 1.5, %v534
      %v536 = vmul.f32 %v531, %v535
      %vm537 = vweird.f32 %v530
      %vm538 = vweird.f32 %v531
      %vm539 = vmor %vm537, %vm538
      %v540 = vsel %vm539, %v531, %v536
      %v541 = vmul.f32 %v428, %v540
      %v542 = vmul.f32 %v429, %v540
      %v543 = vmul.f32 %v430, %v540
      %v544 = vmul.f32 %v431, %v540
      %v545 = vmul.f32 %v432, %v540
      %v546 = vmul.f32 %v433, %v540
      %v547 = vmul.f32 %v434, %v540
      %v548 = vmul.f32 %v435, %v540
      %v549 = vmul.f32 %v436, %v540
      %v550 = vmul.f32 %v437, %v540
      %v551 = vmul.f32 %v438, %v540
      %v552 = vmul.f32 %v439, %v540
      %v553 = vmul.f32 %v440, %v540
      %v554 = vmul.f32 %v441, %v540
      %v555 = vmul.f32 %v442, %v540
      %v556 = vmul.f32 %v443, %v540
      %v557 = vmul.f32 %v444, %v540
      %v558 = vmul.f32 %v445, %v540
      %v559 = vmul.f32 %v446, %v540
      %v560 = vmul.f32 %v447, %v540
      %v561 = vmul.f32 %v448, %v540
      %v562 = vmul.f32 %v449, %v540
      %v563 = vmul.f32 %v450, %v540
      %v564 = vmul.f32 %v451, %v540
      %v565 = vmul.f32 %v452, %v540
      %v566 = vmul.f32 %v453, %v540
      %v567 = vmul.f32 %v454, %v540
      %v568 = vmul.f32 %v455, %v540
      %v569 = vmul.f32 %v456, %v540
      %v570 = vmul.f32 %v457, %v540
      %v571 = vmul.f32 %v458, %v540
      %v572 = vmul.f32 %v459, %v540
      %v573 = vld [vmem:[%s212] sm:$0xff]
      %v574 = vld [vmem:[%s212 + $0x8] sm:$0xff]
      %v575 = vld [vmem:[%s212 + $0x10] sm:$0xff]
      %v576 = vld [vmem:[%s212 + $0x18] sm:$0xff]
      %v577 = vld [vmem:[%s212 + $0x20] sm:$0xff]
      %v578 = vld [vmem:[%s212 + $0x28] sm:$0xff]
      %v579 = vld [vmem:[%s212 + $0x30] sm:$0xff]
      %v580 = vld [vmem:[%s212 + $0x38] sm:$0xff]
      %v581 = vld [vmem:[%s212 + $0x40] sm:$0xff]
      %v582 = vld [vmem:[%s212 + $0x48] sm:$0xff]
      %v583 = vld [vmem:[%s212 + $0x50] sm:$0xff]
      %v584 = vld [vmem:[%s212 + $0x58] sm:$0xff]
      %v585 = vld [vmem:[%s212 + $0x60] sm:$0xff]
      %v586 = vld [vmem:[%s212 + $0x68] sm:$0xff]
      %v587 = vld [vmem:[%s212 + $0x70] sm:$0xff]
      %v588 = vld [vmem:[%s212 + $0x78] sm:$0xff]
      %v589 = vld [vmem:[%s212 + $0x80] sm:$0xff]
      %v590 = vld [vmem:[%s212 + $0x88] sm:$0xff]
      %v591 = vld [vmem:[%s212 + $0x90] sm:$0xff]
      %v592 = vld [vmem:[%s212 + $0x98] sm:$0xff]
      %v593 = vld [vmem:[%s212 + $0xa0] sm:$0xff]
      %v594 = vld [vmem:[%s212 + $0xa8] sm:$0xff]
      %v595 = vld [vmem:[%s212 + $0xb0] sm:$0xff]
      %v596 = vld [vmem:[%s212 + $0xb8] sm:$0xff]
      %v597 = vld [vmem:[%s212 + $0xc0] sm:$0xff]
      %v598 = vld [vmem:[%s212 + $0xc8] sm:$0xff]
      %v599 = vld [vmem:[%s212 + $0xd0] sm:$0xff]
      %v600 = vld [vmem:[%s212 + $0xd8] sm:$0xff]
      %v601 = vld [vmem:[%s212 + $0xe0] sm:$0xff]
      %v602 = vld [vmem:[%s212 + $0xe8] sm:$0xff]
      %v603 = vld [vmem:[%s212 + $0xf0] sm:$0xff]
      %v604 = vld [vmem:[%s212 + $0xf8] sm:$0xff]
      %v605 = vadd.f32 %v573, %v541
      %v606 = vadd.f32 %v574, %v542
      %v607 = vadd.f32 %v575, %v543
      %v608 = vadd.f32 %v576, %v544
      %v609 = vadd.f32 %v577, %v545
      %v610 = vadd.f32 %v578, %v546
      %v611 = vadd.f32 %v579, %v547
      %v612 = vadd.f32 %v580, %v548
      %v613 = vadd.f32 %v581, %v549
      %v614 = vadd.f32 %v582, %v550
      %v615 = vadd.f32 %v583, %v551
      %v616 = vadd.f32 %v584, %v552
      %v617 = vadd.f32 %v585, %v553
      %v618 = vadd.f32 %v586, %v554
      %v619 = vadd.f32 %v587, %v555
      %v620 = vadd.f32 %v588, %v556
      %v621 = vadd.f32 %v589, %v557
      %v622 = vadd.f32 %v590, %v558
      %v623 = vadd.f32 %v591, %v559
      %v624 = vadd.f32 %v592, %v560
      %v625 = vadd.f32 %v593, %v561
      %v626 = vadd.f32 %v594, %v562
      %v627 = vadd.f32 %v595, %v563
      %v628 = vadd.f32 %v596, %v564
      %v629 = vadd.f32 %v597, %v565
      %v630 = vadd.f32 %v598, %v566
      %v631 = vadd.f32 %v599, %v567
      %v632 = vadd.f32 %v600, %v568
      %v633 = vadd.f32 %v601, %v569
      %v634 = vadd.f32 %v602, %v570
      %v635 = vadd.f32 %v603, %v571
      %v636 = vadd.f32 %v604, %v572
      %637 = vst [vmem:[%s217] sm:$0xff] %v605
      %638 = vst [vmem:[%s217 + $0x8] sm:$0xff] %v606
      %639 = vst [vmem:[%s217 + $0x10] sm:$0xff] %v607
      %640 = vst [vmem:[%s217 + $0x18] sm:$0xff] %v608
      %641 = vst [vmem:[%s217 + $0x20] sm:$0xff] %v609
      %642 = vst [vmem:[%s217 + $0x28] sm:$0xff] %v610
      %643 = vst [vmem:[%s217 + $0x30] sm:$0xff] %v611
      %644 = vst [vmem:[%s217 + $0x38] sm:$0xff] %v612
      %645 = vst [vmem:[%s217 + $0x40] sm:$0xff] %v613
      %646 = vst [vmem:[%s217 + $0x48] sm:$0xff] %v614
      %647 = vst [vmem:[%s217 + $0x50] sm:$0xff] %v615
      %648 = vst [vmem:[%s217 + $0x58] sm:$0xff] %v616
      %649 = vst [vmem:[%s217 + $0x60] sm:$0xff] %v617
      %650 = vst [vmem:[%s217 + $0x68] sm:$0xff] %v618
      %651 = vst [vmem:[%s217 + $0x70] sm:$0xff] %v619
      %652 = vst [vmem:[%s217 + $0x78] sm:$0xff] %v620
      %653 = vst [vmem:[%s217 + $0x80] sm:$0xff] %v621
      %654 = vst [vmem:[%s217 + $0x88] sm:$0xff] %v622
      %655 = vst [vmem:[%s217 + $0x90] sm:$0xff] %v623
      %656 = vst [vmem:[%s217 + $0x98] sm:$0xff] %v624
      %657 = vst [vmem:[%s217 + $0xa0] sm:$0xff] %v625
      %658 = vst [vmem:[%s217 + $0xa8] sm:$0xff] %v626
      %659 = vst [vmem:[%s217 + $0xb0] sm:$0xff] %v627
      %660 = vst [vmem:[%s217 + $0xb8] sm:$0xff] %v628
      %661 = vst [vmem:[%s217 + $0xc0] sm:$0xff] %v629
      %662 = vst [vmem:[%s217 + $0xc8] sm:$0xff] %v630
      %663 = vst [vmem:[%s217 + $0xd0] sm:$0xff] %v631
      %664 = vst [vmem:[%s217 + $0xd8] sm:$0xff] %v632
      %665 = vst [vmem:[%s217 + $0xe0] sm:$0xff] %v633
      %666 = vst [vmem:[%s217 + $0xe8] sm:$0xff] %v634
      %667 = vst [vmem:[%s217 + $0xf0] sm:$0xff] %v635
      %668 = vst [vmem:[%s217 + $0xf8] sm:$0xff] %v636
      %p669 = scmp.lt.s32.totalorder %s15, 1
      %s670 = scalar_select %p669, %s15, 1
      %s671 = smul.addr %s670, 32
      %s672 = smul.addr %s671, 8
      %s673 = scalar_lea.vmem %s4, %s672
      // Predicated region
      $region37: #{resblock_forward.3} parent=35 // pred_check
        %p674 = pneg %p127
      $region38: #{resblock_forward.3} parent=35 // pred_check_branch
        %676 = sbr.rel (%p674) target = $region40
      $region39: #{resblock_forward.3} parent=35 // pred_region
        _
      $region40: #{resblock_forward.3} parent=35 // pred_fallthru
        _
    $region36: #{resblock_forward.3} parent=5 // pred_fallthru
      _
    %p677 = scmp.le.s32.totalorder 2, %s10
    // Predicated region
    $region41: #{resblock_forward.3} parent=5 // pred_check
      %p678 = pneg %p677
    $region42: #{resblock_forward.3} parent=5 // pred_check_branch
      %680 = sbr.rel (%p678) target = $region44
    $region43: #{resblock_forward.3} parent=5 // pred_region
      %s681 = ssub.s32 %s10, 2
      // Predicated region
      $region45: #{resblock_forward.3} parent=43 // pred_check
        %p682 = pneg %p133
      $region46: #{resblock_forward.3} parent=43 // pred_check_branch
        %684 = sbr.rel (%p682) target = $region48
      $region47: #{resblock_forward.3} parent=43 // pred_region
        %p685 = scmp.lt.s32.totalorder %s16, 1
        %s686 = scalar_select %p685, %s16, 1
        %s687 = smul.addr %s686, 32
        %s688 = smul.addr %s687, 8
        %s689 = scalar_lea.vmem %s4, %s688
      $region48: #{resblock_forward.3} parent=43 // pred_fallthru
        _
    $region44: #{resblock_forward.3} parent=5 // pred_fallthru
      _
  $region6: #{resblock_forward.3} parent=0 // loop_footer
    %s14 = sadd.s32 1, %s10
  $region7: #{resblock_forward.3} parent=0 // loop_footer_branch
    %9 = sbr.rel target = $region3
  $region8: #{resblock_forward.3} parent=0 // loop_exit
    _

</llo_original>
